<compile_context>
chip_gen: v7x
topology: tpu7x:2x2x1
jax: 0.10.0
libtpu: 0.0.40
codegen_flags: <defaults>
</compile_context>

<pallas_src>
import jax
import jax.numpy as jnp
from jax.experimental import pallas as pl
from jax.experimental.pallas import tpu as pltpu

_BN_EPS = 1e-5
_VMEM_LIMIT = 32 * 1024 * 1024  # fits default scoped VMEM on v5e/v6e/v7x


def _pass1_kernel(a_ref, xk_ref, xi_ref, w_ref, wr_ref, bias_ref,
                  h_ref, psum_ref, psumsq_ref, acc_ref):
    """Aggregate + project + residual; emit pre-BN h and per-tile BN partials."""
    k = pl.program_id(1)

    @pl.when(k == 0)
    def _():
        acc_ref[...] = jnp.zeros_like(acc_ref)

    # Dominant O(N^2) matmul: contract against F_in (A_hat @ x first).
    # bf16 operands, f32 accumulation on the MXU.
    acc_ref[...] += jnp.dot(a_ref[...], xk_ref[...],
                            preferred_element_type=jnp.float32)

    @pl.when(k == pl.num_programs(1) - 1)
    def _():
        agg = acc_ref[...]                              # (TM, F_in) = rows of A_hat @ x
        xr = xi_ref[...].astype(jnp.float32)            # residual input rows (f32 math)
        # Projection + residual Linear with combined bias (b + b_res),
        # lane-dense (padded) F_out.  activation=None, dropout(p=0) == identity.
        h = (jnp.dot(agg, w_ref[...], preferred_element_type=jnp.float32)
             + jnp.dot(xr, wr_ref[...], preferred_element_type=jnp.float32)
             + bias_ref[...])
        h_ref[...] = h
        # Single-pass BN statistics: per-row-tile sum and sum-of-squares.
        psum_ref[...] = jnp.sum(h, axis=0, keepdims=True)[None]
        psumsq_ref[...] = jnp.sum(h * h, axis=0, keepdims=True)[None]


def _bn_apply_kernel(h_ref, scale_ref, shift_ref, o_ref):
    """BatchNorm folded into one FMA: out = h * scale + shift."""
    o_ref[...] = (h_ref[...] * scale_ref[...] + shift_ref[...]).astype(o_ref.dtype)


def _pick_tile(n, candidates=(512, 256, 128)):
    for t in candidates:
        if n % t == 0:
            return t
    return n  # small / odd graphs: fall back to full extent


def gcn_layer(a_hat, x, w, b, w_res, b_res, gamma, beta, *, tm=None, tk=None):
    N, F_in = x.shape
    F_out = w.shape[1]
    F_pad = ((F_out + 127) // 128) * 128          # lane-dense output width

    tm = tm or _pick_tile(N)
    tk = tk or _pick_tile(N)
    n_i, n_k = N // tm, N // tk

    def pad_cols(v2d):
        return jnp.pad(v2d.astype(jnp.float32), ((0, 0), (0, F_pad - F_out)))

    w_p = pad_cols(w)
    wr_p = pad_cols(w_res)
    bias_p = pad_cols((b + b_res).reshape(1, F_out))          # pre-summed biases
    gamma_p = pad_cols(gamma.reshape(1, F_out))
    beta_p = pad_cols(beta.reshape(1, F_out))

    # Stream the big operands as bf16 (f32 accumulation keeps BN math exact-ish).
    a_bf = a_hat.astype(jnp.bfloat16)
    x_bf = x.astype(jnp.bfloat16)

    # ---- Pass 1: tiled aggregation + projection + residual, BN partials ----
    h, psum, psumsq = pl.pallas_call(
        _pass1_kernel,
        out_shape=(
            jax.ShapeDtypeStruct((N, F_pad), jnp.float32),        # pre-BN h
            jax.ShapeDtypeStruct((n_i, 1, F_pad), jnp.float32),   # per-tile sum
            jax.ShapeDtypeStruct((n_i, 1, F_pad), jnp.float32),   # per-tile sum of squares
        ),
        grid=(n_i, n_k),
        in_specs=[
            pl.BlockSpec((tm, tk), lambda i, k: (i, k)),        # A_hat tile (bf16)
            pl.BlockSpec((tk, F_in), lambda i, k: (k, 0)),      # x rows (aggregation)
            pl.BlockSpec((tm, F_in), lambda i, k: (i, 0)),      # x rows (residual)
            pl.BlockSpec((F_in, F_pad), lambda i, k: (0, 0)),   # W   (lane-padded)
            pl.BlockSpec((F_in, F_pad), lambda i, k: (0, 0)),   # W_res (lane-padded)
            pl.BlockSpec((1, F_pad), lambda i, k: (0, 0)),      # b + b_res
        ],
        out_specs=(
            pl.BlockSpec((tm, F_pad), lambda i, k: (i, 0)),
            pl.BlockSpec((1, 1, F_pad), lambda i, k: (i, 0, 0)),
            pl.BlockSpec((1, 1, F_pad), lambda i, k: (i, 0, 0)),
        ),
        scratch_shapes=[pltpu.VMEM((tm, F_in), jnp.float32)],   # A_hat @ x accumulator
        compiler_params=pltpu.CompilerParams(
            dimension_semantics=("parallel", "arbitrary"),
            vmem_limit_bytes=_VMEM_LIMIT),
    )(a_bf, x_bf, x_bf, w_p, wr_p, bias_p)

    # ---- Tiny cross-tile reduction (XLA): fold BN into one scale/shift ----
    total = jnp.sum(psum[:, 0, :], axis=0)
    total_sq = jnp.sum(psumsq[:, 0, :], axis=0)
    mean = total / N
    var = total_sq / N - mean * mean                 # biased variance (training BN)
    scale = gamma_p[0] * jax.lax.rsqrt(var + _BN_EPS)
    shift = beta_p[0] - mean * scale

    # ---- Pass 2: apply BN (one FMA per element), rows fully parallel ----
    out_pad = pl.pallas_call(
        _bn_apply_kernel,
        out_shape=jax.ShapeDtypeStruct((N, F_pad), jnp.float32),
        grid=(n_i,),
        in_specs=[
            pl.BlockSpec((tm, F_pad), lambda i: (i, 0)),
            pl.BlockSpec((1, F_pad), lambda i: (0, 0)),
            pl.BlockSpec((1, F_pad), lambda i: (0, 0)),
        ],
        out_specs=pl.BlockSpec((tm, F_pad), lambda i: (i, 0)),
        compiler_params=pltpu.CompilerParams(
            dimension_semantics=("parallel",),
            vmem_limit_bytes=_VMEM_LIMIT),
    )(h, scale.reshape(1, F_pad), shift.reshape(1, F_pad))

    return out_pad[:, :F_out]


def reference(a_hat, x, w, b, w_res, b_res, gamma, beta):
    h = a_hat @ (x @ w) + b
    h = h + (x @ w_res + b_res)
    mean = h.mean(axis=0, keepdims=True)
    var = ((h - mean) ** 2).mean(axis=0, keepdims=True)
    return (h - mean) / jnp.sqrt(var + _BN_EPS) * gamma + beta


if __name__ == "__main__":
    N, in_feats, out_feats = 256, 16, 32   # small synthetic graph

    key = jax.random.PRNGKey(0)
    k_adj, k_x, k_w, k_b, k_wr, k_br, k_g, k_bt = jax.random.split(key, 8)

    # random undirected graph with self-loops, symmetric normalization
    adj = (jax.random.uniform(k_adj, (N, N)) < 0.05).astype(jnp.float32)
    adj = jnp.maximum(adj, adj.T)
    adj = jnp.maximum(adj, jnp.eye(N, dtype=jnp.float32))
    deg = adj.sum(axis=1)
    d_inv_sqrt = 1.0 / jnp.sqrt(deg)
    a_hat = adj * d_inv_sqrt[:, None] * d_inv_sqrt[None, :]

    feats = jax.random.normal(k_x, (N, in_feats), dtype=jnp.float32)

    # deterministic synthetic parameters (shapes from the module __init__)
    w = jax.random.normal(k_w, (in_feats, out_feats), jnp.float32) * 0.1
    b = jax.random.normal(k_b, (out_feats,), jnp.float32) * 0.1
    w_res = jax.random.normal(k_wr, (in_feats, out_feats), jnp.float32) * 0.1
    b_res = jax.random.normal(k_br, (out_feats,), jnp.float32) * 0.1
    gamma = 1.0 + 0.1 * jax.random.normal(k_g, (out_feats,), jnp.float32)
    beta = 0.1 * jax.random.normal(k_bt, (out_feats,), jnp.float32)

    out = gcn_layer(a_hat, feats, w, b, w_res, b_res, gamma, beta, tm=128, tk=128)
    out = jax.block_until_ready(out)

    ref = reference(a_hat, feats, w, b, w_res, b_res, gamma, beta)
    assert out.shape == (N, out_feats)
    # bf16 streaming of A_hat/x (f32 accumulation) introduces ~1e-3 abs error.
    assert jnp.allclose(out, ref, rtol=2e-2, atol=2e-2), float(
        jnp.max(jnp.abs(out - ref)))

    print("KERNEL_OK")
</pallas_src>

<mosaic_0001>
module attributes {stable_mosaic.version = 11 : i64} {
  func.func @_pass1_kernel(%arg0: i32, %arg1: i32, %arg2: memref<128x128xbf16, #tpu.memory_space<vmem>>, %arg3: memref<128x16xbf16, #tpu.memory_space<vmem>>, %arg4: memref<128x16xbf16, #tpu.memory_space<vmem>>, %arg5: memref<16x128xf32, #tpu.memory_space<vmem>>, %arg6: memref<16x128xf32, #tpu.memory_space<vmem>>, %arg7: memref<1x128xf32, #tpu.memory_space<vmem>>, %arg8: memref<128x128xf32, #tpu.memory_space<vmem>>, %arg9: memref<1x1x128xf32, #tpu.memory_space<vmem>>, %arg10: memref<1x1x128xf32, #tpu.memory_space<vmem>>, %arg11: memref<128x16xf32, #tpu.memory_space<vmem>>) attributes {dimension_semantics = [#tpu.dimension_semantics<parallel>, #tpu.dimension_semantics<arbitrary>], iteration_bounds = array<i64: 2, 2>, scalar_prefetch = 0 : i64, scratch_operands = 1 : i64, tpu.core_type = #tpu.core_type<tc>, window_params = [{transform_indices = @transform_0, window_bounds = array<i64: 128, 128>}, {transform_indices = @transform_1, window_bounds = array<i64: 128, 16>}, {transform_indices = @transform_2, window_bounds = array<i64: 128, 16>}, {pipeline_mode = #tpu.pipeline_mode<synchronous>, transform_indices = @transform_3, window_bounds = array<i64: 16, 128>}, {pipeline_mode = #tpu.pipeline_mode<synchronous>, transform_indices = @transform_4, window_bounds = array<i64: 16, 128>}, {pipeline_mode = #tpu.pipeline_mode<synchronous>, transform_indices = @transform_5, window_bounds = array<i64: 1, 128>}, {transform_indices = @transform_6, window_bounds = array<i64: 128, 128>}, {transform_indices = @transform_7, window_bounds = array<i64: 1, 1, 128>}, {transform_indices = @transform_8, window_bounds = array<i64: 1, 1, 128>}]} {
    %c0_i32 = arith.constant 0 : i32
    %0 = arith.cmpi eq, %arg1, %c0_i32 : i32
    %1 = arith.extui %0 : i1 to i32
    %c0_i32_0 = arith.constant 0 : i32
    %2 = arith.cmpi ne, %1, %c0_i32_0 : i32
    scf.if %2 {
      %cst_9 = arith.constant 0.000000e+00 : f32
      %12 = vector.broadcast %cst_9 : f32 to vector<128x16xf32>
      %c0_10 = arith.constant 0 : index
      %c0_11 = arith.constant 0 : index
      %13 = vector.load %arg11[%c0_10, %c0_11] : memref<128x16xf32, #tpu.memory_space<vmem>>, vector<128x16xf32>
      tpu.vector_store %arg11[%c0_10, %c0_11], %12 {strides = array<i32>} : memref<128x16xf32, #tpu.memory_space<vmem>>, vector<128x16xf32>,
    } else {
    }
    %c0 = arith.constant 0 : index
    %c0_1 = arith.constant 0 : index
    %3 = vector.load %arg11[%c0, %c0_1] : memref<128x16xf32, #tpu.memory_space<vmem>>, vector<128x16xf32>
    %c0_2 = arith.constant 0 : index
    %c0_3 = arith.constant 0 : index
    %4 = vector.load %arg2[%c0_2, %c0_3] : memref<128x128xbf16, #tpu.memory_space<vmem>>, vector<128x128xbf16>
    %c0_4 = arith.constant 0 : index
    %c0_5 = arith.constant 0 : index
    %5 = vector.load %arg3[%c0_4, %c0_5] : memref<128x16xbf16, #tpu.memory_space<vmem>>, vector<128x16xbf16>
    %cst = arith.constant dense<0.000000e+00> : vector<128x16xf32>
    %6 = tpu.matmul %4, %5, %cst {dimension_numbers = #tpu.dot_dimension_numbers<[1], [0], [0], [1], [0, 0, 1, 1], [], []>} : vector<128x128xbf16>, vector<128x16xbf16>, vector<128x16xf32> -> vector<128x16xf32>
    %7 = arith.addf %3, %6 : vector<128x16xf32>
    %c0_6 = arith.constant 0 : index
    %c0_7 = arith.constant 0 : index
    %8 = vector.load %arg11[%c0_6, %c0_7] : memref<128x16xf32, #tpu.memory_space<vmem>>, vector<128x16xf32>
    tpu.vector_store %arg11[%c0_6, %c0_7], %7 {strides = array<i32>} : memref<128x16xf32, #tpu.memory_space<vmem>>, vector<128x16xf32>,
    %c1_i32 = arith.constant 1 : i32
    %9 = arith.cmpi eq, %arg1, %c1_i32 : i32
    %10 = arith.extui %9 : i1 to i32
    %c0_i32_8 = arith.constant 0 : i32
    %11 = arith.cmpi ne, %10, %c0_i32_8 : i32
    scf.if %11 {
      %c0_9 = arith.constant 0 : index
      %c0_10 = arith.constant 0 : index
      %12 = vector.load %arg11[%c0_9, %c0_10] : memref<128x16xf32, #tpu.memory_space<vmem>>, vector<128x16xf32>
      %c0_11 = arith.constant 0 : index
      %c0_12 = arith.constant 0 : index
      %13 = vector.load %arg4[%c0_11, %c0_12] : memref<128x16xbf16, #tpu.memory_space<vmem>>, vector<128x16xbf16>
      %14 = arith.extf %13 : vector<128x16xbf16> to vector<128x16xf32>
      %c0_13 = arith.constant 0 : index
      %c0_14 = arith.constant 0 : index
      %15 = vector.load %arg5[%c0_13, %c0_14] : memref<16x128xf32, #tpu.memory_space<vmem>>, vector<16x128xf32>
      %cst_15 = arith.constant dense<0.000000e+00> : vector<128x128xf32>
      %16 = tpu.matmul %12, %15, %cst_15 {dimension_numbers = #tpu.dot_dimension_numbers<[1], [0], [0], [1], [0, 0, 1, 1], [], []>} : vector<128x16xf32>, vector<16x128xf32>, vector<128x128xf32> -> vector<128x128xf32>
      %c0_16 = arith.constant 0 : index
      %c0_17 = arith.constant 0 : index
      %17 = vector.load %arg6[%c0_16, %c0_17] : memref<16x128xf32, #tpu.memory_space<vmem>>, vector<16x128xf32>
      %cst_18 = arith.constant dense<0.000000e+00> : vector<128x128xf32>
      %18 = tpu.matmul %14, %17, %cst_18 {dimension_numbers = #tpu.dot_dimension_numbers<[1], [0], [0], [1], [0, 0, 1, 1], [], []>} : vector<128x16xf32>, vector<16x128xf32>, vector<128x128xf32> -> vector<128x128xf32>
      %19 = arith.addf %16, %18 : vector<128x128xf32>
      %c0_19 = arith.constant 0 : index
      %c0_20 = arith.constant 0 : index
      %20 = vector.load %arg7[%c0_19, %c0_20] : memref<1x128xf32, #tpu.memory_space<vmem>>, vector<1x128xf32>
      %21 = vector.broadcast %20 : vector<1x128xf32> to vector<128x128xf32>
      %22 = arith.addf %19, %21 : vector<128x128xf32>
      %c0_21 = arith.constant 0 : index
      %c0_22 = arith.constant 0 : index
      %23 = vector.load %arg8[%c0_21, %c0_22] : memref<128x128xf32, #tpu.memory_space<vmem>>, vector<128x128xf32>
      tpu.vector_store %arg8[%c0_21, %c0_22], %22 {strides = array<i32>} : memref<128x128xf32, #tpu.memory_space<vmem>>, vector<128x128xf32>,
      %cst_23 = arith.constant dense<0.000000e+00> : vector<128xf32>
      %24 = vector.multi_reduction <add>, %22, %cst_23 [0] : vector<128x128xf32> to vector<128xf32>
      %25 = vector.shape_cast %24 : vector<128xf32> to vector<1x128xf32>
      %26 = vector.shape_cast %25 : vector<1x128xf32> to vector<1x1x128xf32>
      %c0_24 = arith.constant 0 : index
      %c0_25 = arith.constant 0 : index
      %c0_26 = arith.constant 0 : index
      %27 = vector.load %arg9[%c0_24, %c0_25, %c0_26] : memref<1x1x128xf32, #tpu.memory_space<vmem>>, vector<1x1x128xf32>
      tpu.vector_store %arg9[%c0_24, %c0_25, %c0_26], %26 {strides = array<i32>} : memref<1x1x128xf32, #tpu.memory_space<vmem>>, vector<1x1x128xf32>,
      %28 = arith.mulf %22, %22 : vector<128x128xf32>
      %cst_27 = arith.constant dense<0.000000e+00> : vector<128xf32>
      %29 = vector.multi_reduction <add>, %28, %cst_27 [0] : vector<128x128xf32> to vector<128xf32>
      %30 = vector.shape_cast %29 : vector<128xf32> to vector<1x128xf32>
      %31 = vector.shape_cast %30 : vector<1x128xf32> to vector<1x1x128xf32>
      %c0_28 = arith.constant 0 : index
      %c0_29 = arith.constant 0 : index
      %c0_30 = arith.constant 0 : index
      %32 = vector.load %arg10[%c0_28, %c0_29, %c0_30] : memref<1x1x128xf32, #tpu.memory_space<vmem>>, vector<1x1x128xf32>
      tpu.vector_store %arg10[%c0_28, %c0_29, %c0_30], %31 {strides = array<i32>} : memref<1x1x128xf32, #tpu.memory_space<vmem>>, vector<1x1x128xf32>,
    } else {
    }
    return
  }
  func.func @transform_0(%arg0: i32, %arg1: i32) -> (i32, i32) {
    %c0_i32 = arith.constant 0 : i32
    return %arg0, %arg1 : i32, i32
  }
  func.func @transform_1(%arg0: i32, %arg1: i32) -> (i32, i32) {
    %c0_i32 = arith.constant 0 : i32
    %c0_i32_0 = arith.constant 0 : i32
    return %arg1, %c0_i32 : i32, i32
  }
  func.func @transform_2(%arg0: i32, %arg1: i32) -> (i32, i32) {
    %c0_i32 = arith.constant 0 : i32
    %c0_i32_0 = arith.constant 0 : i32
    return %arg0, %c0_i32 : i32, i32
  }
  func.func @transform_3(%arg0: i32, %arg1: i32) -> (i32, i32) {
    %c0_i32 = arith.constant 0 : i32
    %c0_i32_0 = arith.constant 0 : i32
    %c0_i32_1 = arith.constant 0 : i32
    return %c0_i32, %c0_i32_0 : i32, i32
  }
  func.func @transform_4(%arg0: i32, %arg1: i32) -> (i32, i32) {
    %c0_i32 = arith.constant 0 : i32
    %c0_i32_0 = arith.constant 0 : i32
    %c0_i32_1 = arith.constant 0 : i32
    return %c0_i32, %c0_i32_0 : i32, i32
  }
  func.func @transform_5(%arg0: i32, %arg1: i32) -> (i32, i32) {
    %c0_i32 = arith.constant 0 : i32
    %c0_i32_0 = arith.constant 0 : i32
    %c0_i32_1 = arith.constant 0 : i32
    return %c0_i32, %c0_i32_0 : i32, i32
  }
  func.func @transform_6(%arg0: i32, %arg1: i32) -> (i32, i32) {
    %c0_i32 = arith.constant 0 : i32
    %c0_i32_0 = arith.constant 0 : i32
    return %arg0, %c0_i32 : i32, i32
  }
  func.func @transform_7(%arg0: i32, %arg1: i32) -> (i32, i32, i32) {
    %c0_i32 = arith.constant 0 : i32
    %c0_i32_0 = arith.constant 0 : i32
    %c0_i32_1 = arith.constant 0 : i32
    return %arg0, %c0_i32, %c0_i32_0 : i32, i32, i32
  }
  func.func @transform_8(%arg0: i32, %arg1: i32) -> (i32, i32, i32) {
    %c0_i32 = arith.constant 0 : i32
    %c0_i32_0 = arith.constant 0 : i32
    %c0_i32_1 = arith.constant 0 : i32
    return %arg0, %c0_i32, %c0_i32_0 : i32, i32, i32
  }
}

</mosaic_0001>

<llo_original>
// kernel: tpu_custom_call.1
$region0: #{tpu_custom_call.1}
  #allocation0 [shape = 'u32[]', space=smem, size = 0x4, offset = 0x4, fixed_abs, tag = 'smem constant byte address 0x4 - core index']
  #allocation1 [shape = 'u32[144,128]{1,0:T(1,128)}', space=vmem, size = 0x12000, scoped, tag = 'internal scratch']
  #allocation2 [shape = 'f32[128,16]{1,0:T(8,128)}', space=vmem, size = 0x10000, scoped, tag = 'scratch operand']
  %s0 = inlined_call_operand.vmem [shape: bf16[256,256], index: 0, kind: input, shape index: {}]
  %s1 = inlined_call_operand.vmem [shape: bf16[256,16], index: 1, kind: input, shape index: {}]
  %s2 = inlined_call_operand.vmem [shape: bf16[256,16], index: 2, kind: input, shape index: {}]
  %s3 = inlined_call_operand.vmem [shape: f32[16,128], index: 3, kind: input, shape index: {}]
  %s4 = inlined_call_operand.hbm [shape: f32[16,128], index: 4, kind: input, shape index: {}]
  %s5 = inlined_call_operand.vmem [shape: f32[1,128], index: 5, kind: input, shape index: {}]
  %s6 = inlined_call_operand.hbm [shape: f32[256,128], index: 6, kind: output, shape index: {0}]
  %s7 = inlined_call_operand.hbm [shape: f32[2,1,128], index: 7, kind: output, shape index: {1}]
  %s8 = inlined_call_operand.hbm [shape: f32[2,1,128], index: 8, kind: output, shape index: {2}]
  %9 = xla_tuple %s6, %s7, %s8
  %s10 = sld [smem:[#allocation0]]
  $region126: #{tpu_custom_call.1} parent=0
    _
  %s12 = ssub.s32 1, %s10
  %s13 = scalar_select 0, %s12, %s10
  $region1: #{tpu_custom_call.1} parent=0
    #allocation3 [shape = 'u8[65536]{0}', space=vmem, size = 0x10000, scoped, tag = 'input window, operand 0']
    #allocation4 [shape = 'u8[8192]{0}', space=vmem, size = 0x2000, scoped, tag = 'input window, operand 4, single buffered']
    #allocation5 [shape = 's32[2]{0}', space=sflag, size = 0x8, scoped, tag = 'scoped memory for tpu_custom_call.1']
    #allocation6 [shape = 's32[2]{0}', space=sflag, size = 0x8, scoped, tag = 'scoped memory for tpu_custom_call.1']
    #allocation7 [shape = 'u8[131072]{0}', space=vmem, size = 0x20000, scoped, tag = 'output window, operand 0']
    #allocation8 [shape = 'u8[1024]{0}', space=vmem, size = 0x400, scoped, tag = 'output window, operand 1']
    #allocation9 [shape = 's32[2]{0}', space=sflag, size = 0x8, scoped, tag = 'scoped memory for tpu_custom_call.1']
    #allocation10 [shape = 'u8[1024]{0}', space=vmem, size = 0x400, scoped, tag = 'output window, operand 2']
    %14 = vsyncpa [#allocation5], 0
    %15 = vsyncpa [#allocation6], 0
    %s16 = scalar_lea.sflag [#allocation6], 1
    %17 = vsyncpa %s16, 0
    %18 = vsyncpa [#allocation9], 0
    %s19 = scalar_lea.sflag [#allocation9], 1
    %20 = vsyncpa %s19, 0
    loop: start=0, step=1, limit=6
    $region2: #{tpu_custom_call.1} parent=1 // loop_pre_header
      _
    $region3: #{tpu_custom_call.1} parent=1 // loop_header
      %s22 = sphi 0, %s26
      %p23 = scmp.ge.s32.totalorder %s22, 6
      %s29 = sphi 0, %s41
      %s30 = sphi 0, %s37
      %s31 = sphi 0, %s29
      %s32 = sphi 0, %s30
      %s33 = sphi 0, %s31
      %s34 = sphi 0, %s32
      %s46 = sphi 0, %s48
      %s49 = sphi 0, %s46
      %s50 = sphi 0, %s49
      %s66 = sphi 0, %s50
      %s72 = sphi 0, %s74
      %s75 = sphi 0, %s72
      %s76 = sphi 0, %s75
      %s92 = sphi 0, %s76
      %s98 = sphi 0, %s100
      %s101 = sphi 0, %s98
      %s102 = sphi 0, %s101
      %s118 = sphi 0, %s102
      %s122 = sphi 0, %s122
      %s124 = sphi 0, %s122
      %s125 = sphi 0, %s124
      %s139 = sphi 0, %s125
      %s143 = sphi 0, %s143
      %s145 = sphi 0, %s143
      %s146 = sphi 0, %s145
      %s160 = sphi 0, %s146
      %s164 = sphi 0, %s164
      %s166 = sphi 0, %s164
      %s167 = sphi 0, %s166
      %s181 = sphi 0, %s167
      %s187 = sphi 0, %s189
      %s190 = sphi 0, %s187
      %s191 = sphi 0, %s190
      %s207 = sphi 0, %s191
      %s213 = sphi 0, %s215
      %s216 = sphi 0, %s213
      %s217 = sphi 0, %s216
      %s233 = sphi 0, %s217
      %s239 = sphi 0, %s241
      %s242 = sphi 0, %s239
      %s243 = sphi 0, %s242
      %s259 = sphi 0, %s243
    $region4: #{tpu_custom_call.1} parent=1 // loop_header_branch
      %25 = sbr.rel (%p23) target = $region8
    $region5: #{tpu_custom_call.1} parent=1 // loop_body
      %s27 = ssub.s32 %s22, 1
      %s28 = ssub.s32 %s22, 2
      %s35 = sadd.s32 1, %s30
      %p36 = scmp.ge.s32.totalorder %s35, 2
      %s37 = scalar_select %p36, 0, %s35
      %s38 = sadd.s32 1, %s29
      %s39 = scalar_select %p36, %s38, %s29
      %p40 = scmp.ge.s32.totalorder %s39, 2
      %s41 = scalar_select %p40, 0, %s39
      %s42 = ssub.s32 %s29, %s41
      %s43 = ssub.s32 %s30, %s37
      %s44 = sor.u32 %s42, %s43
      %p45 = scmp.eq.s32.totalorder %s44, 0
      %s47 = sadd.s32 %s46, 1
      %s48 = scalar_select %p45, %s46, %s47
      %p51 = pneg %p45
      %p52 = scmp.eq.s32.totalorder %s22, 3
      %p53 = por %p51, %p52
      %p54 = scmp.ne.s32.totalorder %s46, %s49
      %p55 = scmp.eq.s32.totalorder %s22, 0
      %p56 = por %p54, %p55
      %p57 = scmp.ne.s32.totalorder %s46, %s49
      %p58 = scmp.eq.s32.totalorder %s27, 3
      %p59 = por %p57, %p58
      %p60 = scmp.ne.s32.totalorder %s49, %s50
      %p61 = scmp.eq.s32.totalorder %s27, 0
      %p62 = por %p60, %p61
      %p63 = scmp.ne.s32.totalorder %s49, %s50
      %p64 = scmp.eq.s32.totalorder %s28, 3
      %p65 = por %p63, %p64
      %p67 = scmp.ne.s32.totalorder %s50, %s66
      %p68 = scmp.eq.s32.totalorder %s28, 0
      %p69 = por %p67, %p68
      %s70 = ssub.s32 %s30, %s37
      %p71 = scmp.eq.s32.totalorder %s70, 0
      %s73 = sadd.s32 %s72, 1
      %s74 = scalar_select %p71, %s72, %s73
      %p77 = pneg %p71
      %p78 = scmp.eq.s32.totalorder %s22, 3
      %p79 = por %p77, %p78
      %p80 = scmp.ne.s32.totalorder %s72, %s75
      %p81 = scmp.eq.s32.totalorder %s22, 0
      %p82 = por %p80, %p81
      %p83 = scmp.ne.s32.totalorder %s72, %s75
      %p84 = scmp.eq.s32.totalorder %s27, 3
      %p85 = por %p83, %p84
      %p86 = scmp.ne.s32.totalorder %s75, %s76
      %p87 = scmp.eq.s32.totalorder %s27, 0
      %p88 = por %p86, %p87
      %p89 = scmp.ne.s32.totalorder %s75, %s76
      %p90 = scmp.eq.s32.totalorder %s28, 3
      %p91 = por %p89, %p90
      %p93 = scmp.ne.s32.totalorder %s76, %s92
      %p94 = scmp.eq.s32.totalorder %s28, 0
      %p95 = por %p93, %p94
      %s96 = ssub.s32 %s29, %s41
      %p97 = scmp.eq.s32.totalorder %s96, 0
      %s99 = sadd.s32 %s98, 1
      %s100 = scalar_select %p97, %s98, %s99
      %p103 = pneg %p97
      %p104 = scmp.eq.s32.totalorder %s22, 3
      %p105 = por %p103, %p104
      %p106 = scmp.ne.s32.totalorder %s98, %s101
      %p107 = scmp.eq.s32.totalorder %s22, 0
      %p108 = por %p106, %p107
      %p109 = scmp.ne.s32.totalorder %s98, %s101
      %p110 = scmp.eq.s32.totalorder %s27, 3
      %p111 = por %p109, %p110
      %p112 = scmp.ne.s32.totalorder %s101, %s102
      %p113 = scmp.eq.s32.totalorder %s27, 0
      %p114 = por %p112, %p113
      %p115 = scmp.ne.s32.totalorder %s101, %s102
      %p116 = scmp.eq.s32.totalorder %s28, 3
      %p117 = por %p115, %p116
      %p119 = scmp.ne.s32.totalorder %s102, %s118
      %p120 = scmp.eq.s32.totalorder %s28, 0
      %p121 = por %p119, %p120
      %s123 = sadd.s32 %s122, 1
      %p126 = scmp.eq.s32.totalorder %s22, 3
      %p127 = scmp.ne.s32.totalorder %s122, %s124
      %p128 = scmp.eq.s32.totalorder %s22, 0
      %p129 = por %p127, %p128
      %p130 = scmp.ne.s32.totalorder %s122, %s124
      %p131 = scmp.eq.s32.totalorder %s27, 3
      %p132 = por %p130, %p131
      %p133 = scmp.ne.s32.totalorder %s124, %s125
      %p134 = scmp.eq.s32.totalorder %s27, 0
      %p135 = por %p133, %p134
      %p136 = scmp.ne.s32.totalorder %s124, %s125
      %p137 = scmp.eq.s32.totalorder %s28, 3
      %p138 = por %p136, %p137
      %p140 = scmp.ne.s32.totalorder %s125, %s139
      %p141 = scmp.eq.s32.totalorder %s28, 0
      %p142 = por %p140, %p141
      %s144 = sadd.s32 %s143, 1
      %p147 = scmp.eq.s32.totalorder %s22, 3
      %p148 = scmp.ne.s32.totalorder %s143, %s145
      %p149 = scmp.eq.s32.totalorder %s22, 0
      %p150 = por %p148, %p149
      %p151 = scmp.ne.s32.totalorder %s143, %s145
      %p152 = scmp.eq.s32.totalorder %s27, 3
      %p153 = por %p151, %p152
      %p154 = scmp.ne.s32.totalorder %s145, %s146
      %p155 = scmp.eq.s32.totalorder %s27, 0
      %p156 = por %p154, %p155
      %p157 = scmp.ne.s32.totalorder %s145, %s146
      %p158 = scmp.eq.s32.totalorder %s28, 3
      %p159 = por %p157, %p158
      %p161 = scmp.ne.s32.totalorder %s146, %s160
      %p162 = scmp.eq.s32.totalorder %s28, 0
      %p163 = por %p161, %p162
      %s165 = sadd.s32 %s164, 1
      %p168 = scmp.eq.s32.totalorder %s22, 3
      %p169 = scmp.ne.s32.totalorder %s164, %s166
      %p170 = scmp.eq.s32.totalorder %s22, 0
      %p171 = por %p169, %p170
      %p172 = scmp.ne.s32.totalorder %s164, %s166
      %p173 = scmp.eq.s32.totalorder %s27, 3
      %p174 = por %p172, %p173
      %p175 = scmp.ne.s32.totalorder %s166, %s167
      %p176 = scmp.eq.s32.totalorder %s27, 0
      %p177 = por %p175, %p176
      %p178 = scmp.ne.s32.totalorder %s166, %s167
      %p179 = scmp.eq.s32.totalorder %s28, 3
      %p180 = por %p178, %p179
      %p182 = scmp.ne.s32.totalorder %s167, %s181
      %p183 = scmp.eq.s32.totalorder %s28, 0
      %p184 = por %p182, %p183
      %s185 = ssub.s32 %s29, %s41
      %p186 = scmp.eq.s32.totalorder %s185, 0
      %s188 = sadd.s32 %s187, 1
      %s189 = scalar_select %p186, %s187, %s188
      %p192 = pneg %p186
      %p193 = scmp.eq.s32.totalorder %s22, 3
      %p194 = por %p192, %p193
      %p195 = scmp.ne.s32.totalorder %s187, %s190
      %p196 = scmp.eq.s32.totalorder %s22, 0
      %p197 = por %p195, %p196
      %p198 = scmp.ne.s32.totalorder %s187, %s190
      %p199 = scmp.eq.s32.totalorder %s27, 3
      %p200 = por %p198, %p199
      %p201 = scmp.ne.s32.totalorder %s190, %s191
      %p202 = scmp.eq.s32.totalorder %s27, 0
      %p203 = por %p201, %p202
      %p204 = scmp.ne.s32.totalorder %s190, %s191
      %p205 = scmp.eq.s32.totalorder %s28, 3
      %p206 = por %p204, %p205
      %p208 = scmp.ne.s32.totalorder %s191, %s207
      %p209 = scmp.eq.s32.totalorder %s28, 0
      %p210 = por %p208, %p209
      %s211 = ssub.s32 %s29, %s41
      %p212 = scmp.eq.s32.totalorder %s211, 0
      %s214 = sadd.s32 %s213, 1
      %s215 = scalar_select %p212, %s213, %s214
      %p218 = pneg %p212
      %p219 = scmp.eq.s32.totalorder %s22, 3
      %p220 = por %p218, %p219
      %p221 = scmp.ne.s32.totalorder %s213, %s216
      %p222 = scmp.eq.s32.totalorder %s22, 0
      %p223 = por %p221, %p222
      %p224 = scmp.ne.s32.totalorder %s213, %s216
      %p225 = scmp.eq.s32.totalorder %s27, 3
      %p226 = por %p224, %p225
      %p227 = scmp.ne.s32.totalorder %s216, %s217
      %p228 = scmp.eq.s32.totalorder %s27, 0
      %p229 = por %p227, %p228
      %p230 = scmp.ne.s32.totalorder %s216, %s217
      %p231 = scmp.eq.s32.totalorder %s28, 3
      %p232 = por %p230, %p231
      %p234 = scmp.ne.s32.totalorder %s217, %s233
      %p235 = scmp.eq.s32.totalorder %s28, 0
      %p236 = por %p234, %p235
      %s237 = ssub.s32 %s29, %s41
      %p238 = scmp.eq.s32.totalorder %s237, 0
      %s240 = sadd.s32 %s239, 1
      %s241 = scalar_select %p238, %s239, %s240
      %p244 = pneg %p238
      %p245 = scmp.eq.s32.totalorder %s22, 3
      %p246 = por %p244, %p245
      %p247 = scmp.ne.s32.totalorder %s239, %s242
      %p248 = scmp.eq.s32.totalorder %s22, 0
      %p249 = por %p247, %p248
      %p250 = scmp.ne.s32.totalorder %s239, %s242
      %p251 = scmp.eq.s32.totalorder %s27, 3
      %p252 = por %p250, %p251
      %p253 = scmp.ne.s32.totalorder %s242, %s243
      %p254 = scmp.eq.s32.totalorder %s27, 0
      %p255 = por %p253, %p254
      %p256 = scmp.ne.s32.totalorder %s242, %s243
      %p257 = scmp.eq.s32.totalorder %s28, 3
      %p258 = por %p256, %p257
      %p260 = scmp.ne.s32.totalorder %s243, %s259
      %p261 = scmp.eq.s32.totalorder %s28, 0
      %p262 = por %p260, %p261
      %p263 = scmp.le.s32.totalorder 1, %s22
      %p264 = scmp.lt.s32.totalorder %s22, 5
      %p265 = pnand %p263, %p264
      %p266 = pneg %p265
      // Predicated region
      $region9: #{tpu_custom_call.1} parent=5 // pred_check
        _
      $region10: #{tpu_custom_call.1} parent=5 // pred_check_branch
        %268 = sbr.rel (%p265) target = $region12
      $region11: #{tpu_custom_call.1} parent=5 // pred_region
        %s269 = ssub.s32 %s22, 1
        // Predicated region
        $region13: #{tpu_custom_call.1} parent=11 // pred_check
          %p270 = pneg %p135
        $region14: #{tpu_custom_call.1} parent=11 // pred_check_branch
          %272 = sbr.rel (%p270) target = $region16
        $region15: #{tpu_custom_call.1} parent=11 // pred_region
          _
        $region16: #{tpu_custom_call.1} parent=11 // pred_fallthru
          _
        // Predicated region
        $region17: #{tpu_custom_call.1} parent=11 // pred_check
          %p273 = pneg %p156
        $region18: #{tpu_custom_call.1} parent=11 // pred_check_branch
          %275 = sbr.rel (%p273) target = $region20
        $region19: #{tpu_custom_call.1} parent=11 // pred_region
          %s277 = ssub.s32 256, 256
          %278 = vsyncadd [#allocation5], %s277
          %s279 = sshll.u32 [#allocation4], 4
          %s280 = int_to_ptr.vmem [resolvable:$true] %s279
          %285 = dma.hbm_to_vmem [thread:$0]  %s4, 256, %s280, [#allocation5], 128, 128, 8
        $region20: #{tpu_custom_call.1} parent=11 // pred_fallthru
          _
        // Predicated region
        $region21: #{tpu_custom_call.1} parent=11 // pred_check
          %p286 = pneg %p177
        $region22: #{tpu_custom_call.1} parent=11 // pred_check_branch
          %288 = sbr.rel (%p286) target = $region24
        $region23: #{tpu_custom_call.1} parent=11 // pred_region
          _
        $region24: #{tpu_custom_call.1} parent=11 // pred_fallthru
          _
      $region12: #{tpu_custom_call.1} parent=5 // pred_fallthru
        _
      %p289 = scmp.lt.s32.totalorder %s22, 4
      // Predicated region
      $region25: #{tpu_custom_call.1} parent=5 // pred_check
        %p290 = pneg %p289
      $region26: #{tpu_custom_call.1} parent=5 // pred_check_branch
        %292 = sbr.rel (%p290) target = $region28
      $region27: #{tpu_custom_call.1} parent=5 // pred_region
        // Predicated region
        $region29: #{tpu_custom_call.1} parent=27 // pred_check
          %p293 = pneg %p56
        $region30: #{tpu_custom_call.1} parent=27 // pred_check_branch
          %295 = sbr.rel (%p293) target = $region32
        $region31: #{tpu_custom_call.1} parent=27 // pred_region
          %s296 = sand.u32 %s46, 1
          %s297 = sand.u32 %s46, 1
          %s298 = smul.addr %s297, 64
          %s299 = scalar_lea.vmem [#allocation3], %s298
          %s300 = smul.u32 16, %s29
          %s301 = smul.addr %s300, 2
          %s302 = sadd.s32 %s30, %s301
          %s303 = smul.addr %s302, 4
          %s304 = scalar_lea.vmem %s0, %s303
          // Predicated region
          $region33: #{tpu_custom_call.1} parent=31 // pred_check
            _
          $region34: #{tpu_custom_call.1} parent=31 // pred_check_branch
            %306 = sbr.rel (0) target = $region36
          $region35: #{tpu_custom_call.1} parent=31 // pred_region
            // Predicated region
            $region37: #{tpu_custom_call.1} parent=35 // pred_check
              _
            $region38: #{tpu_custom_call.1} parent=35 // pred_check_branch
              %308 = sbr.rel target = $region40
            $region39: #{tpu_custom_call.1} parent=35 // pred_region
              // Predicated region
              $region52: #{tpu_custom_call.1} parent=39 // pred_check
                _
              $region53: #{tpu_custom_call.1} parent=39 // pred_check_branch
                %353 = sbr.rel (0) target = $region55
              $region54: #{tpu_custom_call.1} parent=39 // pred_region
                loop: start=0, step=1, limit=1
                $region56: #{tpu_custom_call.1} parent=54 // loop_pre_header
                  _
                $region57: #{tpu_custom_call.1} parent=54 // loop_header
                  %s355 = sphi 0, %s359
                  %p356 = scmp.ge.s32.totalorder %s355, 1
                  %s360 = sphi %s304, %s304
                  %s361 = sphi %s299, %s299
                $region58: #{tpu_custom_call.1} parent=54 // loop_header_branch
                  %358 = sbr.rel (%p356) target = $region62
                $region59: #{tpu_custom_call.1} parent=54 // loop_body
                  _
                $region60: #{tpu_custom_call.1} parent=54 // loop_footer
                  %s359 = sadd.s32 1, %s355
                $region61: #{tpu_custom_call.1} parent=54 // loop_footer_branch
                  %354 = sbr.rel target = $region57
                $region62: #{tpu_custom_call.1} parent=54 // loop_exit
                  _
                loop: start=0, step=1, limit=1
                $region63: #{tpu_custom_call.1} parent=54 // loop_pre_header
                  _
                $region64: #{tpu_custom_call.1} parent=54 // loop_header
                  %s364 = sphi 0, %s368
                  %p365 = scmp.ge.s32.totalorder %s364, 1
                  %s369 = sphi %s304, %s304
                  %s370 = sphi %s299, %s299
                $region65: #{tpu_custom_call.1} parent=54 // loop_header_branch
                  %367 = sbr.rel (%p365) target = $region69
                $region66: #{tpu_custom_call.1} parent=54 // loop_body
                  %v371 = vld [vmem:[%s369] sm:$0xf]
                  %372 = vst [vmem:[%s370] sm:$0xf] %v371
                  %v373 = vld [vmem:[%s369 + $0x8] sm:$0xf]
                  %374 = vst [vmem:[%s370 + $0x4] sm:$0xf] %v373
                  %v375 = vld [vmem:[%s369 + $0x10] sm:$0xf]
                  %376 = vst [vmem:[%s370 + $0x8] sm:$0xf] %v375
                  %v377 = vld [vmem:[%s369 + $0x18] sm:$0xf]
                  %378 = vst [vmem:[%s370 + $0xc] sm:$0xf] %v377
                  %v379 = vld [vmem:[%s369 + $0x20] sm:$0xf]
                  %380 = vst [vmem:[%s370 + $0x10] sm:$0xf] %v379
                  %v381 = vld [vmem:[%s369 + $0x28] sm:$0xf]
                  %382 = vst [vmem:[%s370 + $0x14] sm:$0xf] %v381
                  %v383 = vld [vmem:[%s369 + $0x30] sm:$0xf]
                  %384 = vst [vmem:[%s370 + $0x18] sm:$0xf] %v383
                  %v385 = vld [vmem:[%s369 + $0x38] sm:$0xf]
                  %386 = vst [vmem:[%s370 + $0x1c] sm:$0xf] %v385
                  %v387 = vld [vmem:[%s369 + $0x40] sm:$0xf]
                  %388 = vst [vmem:[%s370 + $0x20] sm:$0xf] %v387
                  %v389 = vld [vmem:[%s369 + $0x48] sm:$0xf]
                  %390 = vst [vmem:[%s370 + $0x24] sm:$0xf] %v389
                  %v391 = vld [vmem:[%s369 + $0x50] sm:$0xf]
                  %392 = vst [vmem:[%s370 + $0x28] sm:$0xf] %v391
                  %v393 = vld [vmem:[%s369 + $0x58] sm:$0xf]
                  %394 = vst [vmem:[%s370 + $0x2c] sm:$0xf] %v393
                  %v395 = vld [vmem:[%s369 + $0x60] sm:$0xf]
                  %396 = vst [vmem:[%s370 + $0x30] sm:$0xf] %v395
                  %v397 = vld [vmem:[%s369 + $0x68] sm:$0xf]
                  %398 = vst [vmem:[%s370 + $0x34] sm:$0xf] %v397
                  %v399 = vld [vmem:[%s369 + $0x70] sm:$0xf]
                  %400 = vst [vmem:[%s370 + $0x38] sm:$0xf] %v399
                  %v401 = vld [vmem:[%s369 + $0x78] sm:$0xf]
                  %402 = vst [vmem:[%s370 + $0x3c] sm:$0xf] %v401
                $region67: #{tpu_custom_call.1} parent=54 // loop_footer
                  %s368 = sadd.s32 1, %s364
                $region68: #{tpu_custom_call.1} parent=54 // loop_footer_branch
                  %363 = sbr.rel target = $region64
                $region69: #{tpu_custom_call.1} parent=54 // loop_exit
                  _
              $region55: #{tpu_custom_call.1} parent=39 // pred_fallthru
                _
            $region40: #{tpu_custom_call.1} parent=35 // pred_fallthru
              _
            // Predicated region
            $region41: #{tpu_custom_call.1} parent=35 // pred_check
              _
            $region42: #{tpu_custom_call.1} parent=35 // pred_check_branch
              %310 = sbr.rel (0) target = $region44
            $region43: #{tpu_custom_call.1} parent=35 // pred_region
              loop: start=0, step=1, limit=1
              $region45: #{tpu_custom_call.1} parent=43 // loop_pre_header
                _
              $region46: #{tpu_custom_call.1} parent=43 // loop_header
                %s313 = sphi 0, %s317
                %p314 = scmp.ge.s32.totalorder %s313, 1
                %s318 = sphi %s304, %s304
                %s319 = sphi %s299, %s299
              $region47: #{tpu_custom_call.1} parent=43 // loop_header_branch
                %316 = sbr.rel (%p314) target = $region51
              $region48: #{tpu_custom_call.1} parent=43 // loop_body
                %v320 = vld [vmem:[%s318] sm:$0xf]
                %321 = vst [vmem:[%s319] sm:$0xf] %v320
                %v322 = vld [vmem:[%s318 + $0x8] sm:$0xf]
                %323 = vst [vmem:[%s319 + $0x4] sm:$0xf] %v322
                %v324 = vld [vmem:[%s318 + $0x10] sm:$0xf]
                %325 = vst [vmem:[%s319 + $0x8] sm:$0xf] %v324
                %v326 = vld [vmem:[%s318 + $0x18] sm:$0xf]
                %327 = vst [vmem:[%s319 + $0xc] sm:$0xf] %v326
                %v328 = vld [vmem:[%s318 + $0x20] sm:$0xf]
                %329 = vst [vmem:[%s319 + $0x10] sm:$0xf] %v328
                %v330 = vld [vmem:[%s318 + $0x28] sm:$0xf]
                %331 = vst [vmem:[%s319 + $0x14] sm:$0xf] %v330
                %v332 = vld [vmem:[%s318 + $0x30] sm:$0xf]
                %333 = vst [vmem:[%s319 + $0x18] sm:$0xf] %v332
                %v334 = vld [vmem:[%s318 + $0x38] sm:$0xf]
                %335 = vst [vmem:[%s319 + $0x1c] sm:$0xf] %v334
                %v336 = vld [vmem:[%s318 + $0x40] sm:$0xf]
                %337 = vst [vmem:[%s319 + $0x20] sm:$0xf] %v336
                %v338 = vld [vmem:[%s318 + $0x48] sm:$0xf]
                %339 = vst [vmem:[%s319 + $0x24] sm:$0xf] %v338
                %v340 = vld [vmem:[%s318 + $0x50] sm:$0xf]
                %341 = vst [vmem:[%s319 + $0x28] sm:$0xf] %v340
                %v342 = vld [vmem:[%s318 + $0x58] sm:$0xf]
                %343 = vst [vmem:[%s319 + $0x2c] sm:$0xf] %v342
                %v344 = vld [vmem:[%s318 + $0x60] sm:$0xf]
                %345 = vst [vmem:[%s319 + $0x30] sm:$0xf] %v344
                %v346 = vld [vmem:[%s318 + $0x68] sm:$0xf]
                %347 = vst [vmem:[%s319 + $0x34] sm:$0xf] %v346
                %v348 = vld [vmem:[%s318 + $0x70] sm:$0xf]
                %349 = vst [vmem:[%s319 + $0x38] sm:$0xf] %v348
                %v350 = vld [vmem:[%s318 + $0x78] sm:$0xf]
                %351 = vst [vmem:[%s319 + $0x3c] sm:$0xf] %v350
              $region49: #{tpu_custom_call.1} parent=43 // loop_footer
                %s317 = sadd.s32 1, %s313
              $region50: #{tpu_custom_call.1} parent=43 // loop_footer_branch
                %312 = sbr.rel target = $region46
              $region51: #{tpu_custom_call.1} parent=43 // loop_exit
                _
            $region44: #{tpu_custom_call.1} parent=35 // pred_fallthru
              _
          $region36: #{tpu_custom_call.1} parent=31 // pred_fallthru
            _
          %403 = vnop
        $region32: #{tpu_custom_call.1} parent=27 // pred_fallthru
          _
        // Predicated region
        $region70: #{tpu_custom_call.1} parent=27 // pred_check
          %p404 = pneg %p82
        $region71: #{tpu_custom_call.1} parent=27 // pred_check_branch
          %406 = sbr.rel (%p404) target = $region73
        $region72: #{tpu_custom_call.1} parent=27 // pred_region
          %s407 = smul.u32 16, %s30
          %p408 = scmp.lt.s32.totalorder %s407, 31
          %s409 = scalar_select %p408, %s407, 31
          %s410 = smul.addr %s409, 4
          %s411 = scalar_lea.vmem %s1, %s410
          %s412 = smul.u32 16, %s30
        $region73: #{tpu_custom_call.1} parent=27 // pred_fallthru
          _
        // Predicated region
        $region74: #{tpu_custom_call.1} parent=27 // pred_check
          %p413 = pneg %p108
        $region75: #{tpu_custom_call.1} parent=27 // pred_check_branch
          %415 = sbr.rel (%p413) target = $region77
        $region76: #{tpu_custom_call.1} parent=27 // pred_region
          %s416 = smul.u32 16, %s29
          %p417 = scmp.lt.s32.totalorder %s416, 31
          %s418 = scalar_select %p417, %s416, 31
          %s419 = smul.addr %s418, 4
          %s420 = scalar_lea.vmem %s2, %s419
          %s421 = smul.u32 16, %s29
        $region77: #{tpu_custom_call.1} parent=27 // pred_fallthru
          _
      $region28: #{tpu_custom_call.1} parent=5 // pred_fallthru
        _
      %p422 = scmp.le.s32.totalorder 1, %s22
      %p423 = scmp.lt.s32.totalorder %s22, 5
      %p424 = pnand %p422, %p423
      %p425 = pneg %p424
      // Predicated region
      $region78: #{tpu_custom_call.1} parent=5 // pred_check
        _
      $region79: #{tpu_custom_call.1} parent=5 // pred_check_branch
        %427 = sbr.rel (%p424) target = $region81
      $region80: #{tpu_custom_call.1} parent=5 // pred_region
        %s428 = ssub.s32 %s22, 1
        %s429 = sand.u32 %s49, 1
        %s430 = sand.u32 %s49, 1
        %s431 = smul.addr %s430, 64
        %s432 = scalar_lea.vmem [#allocation3], %s431
        // Predicated region
        $region82: #{tpu_custom_call.1} parent=80 // pred_check
          %p433 = pneg %p62
        $region83: #{tpu_custom_call.1} parent=80 // pred_check_branch
          %435 = sbr.rel (%p433) target = $region85
        $region84: #{tpu_custom_call.1} parent=80 // pred_region
          _
        $region85: #{tpu_custom_call.1} parent=80 // pred_fallthru
          _
        // Predicated region
        $region86: #{tpu_custom_call.1} parent=80 // pred_check
          %p436 = pneg %p156
        $region87: #{tpu_custom_call.1} parent=80 // pred_check_branch
          %438 = sbr.rel (%p436) target = $region89
        $region88: #{tpu_custom_call.1} parent=80 // pred_region
          %439 = dma.done [#allocation5], 256
        $region89: #{tpu_custom_call.1} parent=80 // pred_fallthru
          _
        %s440 = sand.u32 %s49, 1
        %s441 = sand.u32 %s49, 1
        %s442 = smul.addr %s441, 64
        %s443 = scalar_lea.vmem [#allocation3], %s442
        %p444 = pneg %p62
        %p445 = pneg %p59
        %s446 = smul.u32 16, %s32
        %p447 = scmp.lt.s32.totalorder %s446, 31
        %s448 = scalar_select %p447, %s446, 31
        %s449 = smul.addr %s448, 4
        %s450 = scalar_lea.vmem %s1, %s449
        %p451 = pneg %p88
        %p452 = pneg %p85
        %s453 = smul.u32 16, %s31
        %p454 = scmp.lt.s32.totalorder %s453, 31
        %s455 = scalar_select %p454, %s453, 31
        %s456 = smul.addr %s455, 4
        %s457 = scalar_lea.vmem %s2, %s456
        %p458 = pneg %p114
        %p459 = pneg %p111
        %p460 = pneg %p135
        %p461 = pneg %p132
        %p462 = pneg %p156
        %p463 = pneg %p153
        %p464 = pneg %p177
        %p465 = pneg %p174
        %p466 = pneg %p203
        %p467 = pneg %p200
        %s468 = sand.u32 %s190, 1
        %s469 = scalar_lea.sflag [#allocation6], %s468
        %s470 = sand.u32 %s190, 1
        %s471 = smul.addr %s470, 128
        %s472 = scalar_lea.vmem [#allocation7], %s471
        %p473 = pneg %p229
        %p474 = pneg %p226
        %s475 = sand.u32 %s27, 1
        %s476 = scalar_lea.sflag [#allocation9], %s475
        %s477 = sand.u32 %s216, 1
        %s478 = scalar_lea.vmem [#allocation8], %s477
        %p479 = pneg %p255
        %p480 = pneg %p252
        %s481 = sand.u32 %s27, 1
        %s482 = scalar_lea.sflag [#allocation9], %s481
        %s483 = sand.u32 %s242, 1
        %s484 = scalar_lea.vmem [#allocation10], %s483
        %s485 = smul.u32 16, %s31
        %s486 = smul.u32 16, %s32
        %p487 = scmp.lt.s32.totalorder %s486, 31
        %s488 = scalar_select %p487, %s486, 31
        %s489 = smul.addr %s488, 4
        %s490 = scalar_lea.vmem %s1, %s489
        %s491 = smul.u32 16, %s32
        %s492 = smul.u32 16, %s31
        %p493 = scmp.lt.s32.totalorder %s492, 31
        %s494 = scalar_select %p493, %s492, 31
        %s495 = smul.addr %s494, 4
        %s496 = scalar_lea.vmem %s2, %s495
        %s497 = smul.u32 16, %s31
        %s498 = smul.u32 16, %s31
        %p500 = scmp.eq.s32.totalorder %s32, 0
        // Predicated region
        $region90: #{tpu_custom_call.1} parent=80 // pred_check
          %p501 = pneg %p500
        $region91: #{tpu_custom_call.1} parent=80 // pred_check_branch
          %503 = sbr.rel (%p501) target = $region93
        $region92: #{tpu_custom_call.1} parent=80 // pred_region
          %vm504 = vcmask 130048
          %505 = vst.msk [vmem:[#allocation2] sm:$0xff] %vm504, 0.0
          %506 = vst.msk [vmem:[#allocation2 + $0x8] sm:$0xff] %vm504, 0.0
          %507 = vst.msk [vmem:[#allocation2 + $0x10] sm:$0xff] %vm504, 0.0
          %508 = vst.msk [vmem:[#allocation2 + $0x18] sm:$0xff] %vm504, 0.0
          %509 = vst.msk [vmem:[#allocation2 + $0x20] sm:$0xff] %vm504, 0.0
          %510 = vst.msk [vmem:[#allocation2 + $0x28] sm:$0xff] %vm504, 0.0
          %511 = vst.msk [vmem:[#allocation2 + $0x30] sm:$0xff] %vm504, 0.0
          %512 = vst.msk [vmem:[#allocation2 + $0x38] sm:$0xff] %vm504, 0.0
          %513 = vst.msk [vmem:[#allocation2 + $0x40] sm:$0xff] %vm504, 0.0
          %514 = vst.msk [vmem:[#allocation2 + $0x48] sm:$0xff] %vm504, 0.0
          %515 = vst.msk [vmem:[#allocation2 + $0x50] sm:$0xff] %vm504, 0.0
          %516 = vst.msk [vmem:[#allocation2 + $0x58] sm:$0xff] %vm504, 0.0
          %517 = vst.msk [vmem:[#allocation2 + $0x60] sm:$0xff] %vm504, 0.0
          %518 = vst.msk [vmem:[#allocation2 + $0x68] sm:$0xff] %vm504, 0.0
          %519 = vst.msk [vmem:[#allocation2 + $0x70] sm:$0xff] %vm504, 0.0
          %520 = vst.msk [vmem:[#allocation2 + $0x78] sm:$0xff] %vm504, 0.0
        $region93: #{tpu_custom_call.1} parent=80 // pred_fallthru
          _
        %v521 = vld [vmem:[#allocation2] sm:$0xff]
        %v522 = vld [vmem:[#allocation2 + $0x8] sm:$0xff]
        %v523 = vld [vmem:[#allocation2 + $0x10] sm:$0xff]
        %v524 = vld [vmem:[#allocation2 + $0x18] sm:$0xff]
        %v525 = vld [vmem:[#allocation2 + $0x20] sm:$0xff]
        %v526 = vld [vmem:[#allocation2 + $0x28] sm:$0xff]
        %v527 = vld [vmem:[#allocation2 + $0x30] sm:$0xff]
        %v528 = vld [vmem:[#allocation2 + $0x38] sm:$0xff]
        %v529 = vld [vmem:[#allocation2 + $0x40] sm:$0xff]
        %v530 = vld [vmem:[#allocation2 + $0x48] sm:$0xff]
        %v531 = vld [vmem:[#allocation2 + $0x50] sm:$0xff]
        %v532 = vld [vmem:[#allocation2 + $0x58] sm:$0xff]
        %v533 = vld [vmem:[#allocation2 + $0x60] sm:$0xff]
        %v534 = vld [vmem:[#allocation2 + $0x68] sm:$0xff]
        %v535 = vld [vmem:[#allocation2 + $0x70] sm:$0xff]
        %v536 = vld [vmem:[#allocation2 + $0x78] sm:$0xff]
        %v537 = vld [vmem:[%s432] sm:$0xf]
        %v538 = vld [vmem:[%s432 + $0x4] sm:$0xf]
        %v539 = vld [vmem:[%s432 + $0x8] sm:$0xf]
        %v540 = vld [vmem:[%s432 + $0xc] sm:$0xf]
        %v541 = vld [vmem:[%s432 + $0x10] sm:$0xf]
        %v542 = vld [vmem:[%s432 + $0x14] sm:$0xf]
        %v543 = vld [vmem:[%s432 + $0x18] sm:$0xf]
        %v544 = vld [vmem:[%s432 + $0x1c] sm:$0xf]
        %v545 = vld [vmem:[%s432 + $0x20] sm:$0xf]
        %v546 = vld [vmem:[%s432 + $0x24] sm:$0xf]
        %v547 = vld [vmem:[%s432 + $0x28] sm:$0xf]
        %v548 = vld [vmem:[%s432 + $0x2c] sm:$0xf]
        %v549 = vld [vmem:[%s432 + $0x30] sm:$0xf]
        %v550 = vld [vmem:[%s432 + $0x34] sm:$0xf]
        %v551 = vld [vmem:[%s432 + $0x38] sm:$0xf]
        %v552 = vld [vmem:[%s432 + $0x3c] sm:$0xf]
        %v553 = vld [vmem:[%s490] sm:$0xf]
        %v554 = vld [vmem:[%s490 + $0x4] sm:$0xf]
        %v555 = vld [vmem:[%s490 + $0x8] sm:$0xf]
        %v556 = vld [vmem:[%s490 + $0xc] sm:$0xf]
        %v557 = vld [vmem:[%s490 + $0x10] sm:$0xf]
        %v558 = vld [vmem:[%s490 + $0x14] sm:$0xf]
        %v559 = vld [vmem:[%s490 + $0x18] sm:$0xf]
        %v560 = vld [vmem:[%s490 + $0x1c] sm:$0xf]
        %v561 = vld [vmem:[%s490 + $0x20] sm:$0xf]
        %v562 = vld [vmem:[%s490 + $0x24] sm:$0xf]
        %v563 = vld [vmem:[%s490 + $0x28] sm:$0xf]
        %v564 = vld [vmem:[%s490 + $0x2c] sm:$0xf]
        %v565 = vld [vmem:[%s490 + $0x30] sm:$0xf]
        %v566 = vld [vmem:[%s490 + $0x34] sm:$0xf]
        %v567 = vld [vmem:[%s490 + $0x38] sm:$0xf]
        %v568 = vld [vmem:[%s490 + $0x3c] sm:$0xf]
        %v585 = vunpack.c.l.b16 %v537
        %v586 = vunpack.c.l.b16 %v538
        %v587 = vunpack.c.l.b16 %v539
        %v588 = vunpack.c.l.b16 %v540
        %v589 = vunpack.c.l.b16 %v541
        %v590 = vunpack.c.l.b16 %v542
        %v591 = vunpack.c.l.b16 %v543
        %v592 = vunpack.c.l.b16 %v544
        %v593 = vunpack.c.l.b16 %v545
        %v594 = vunpack.c.l.b16 %v546
        %v595 = vunpack.c.l.b16 %v547
        %v596 = vunpack.c.l.b16 %v548
        %v597 = vunpack.c.l.b16 %v549
        %v598 = vunpack.c.l.b16 %v550
        %v599 = vunpack.c.l.b16 %v551
        %v600 = vunpack.c.l.b16 %v552
        %v601 = vpack.c.b16 %v586, %v585
        %v602 = vpack.c.b16 %v588, %v587
        %v603 = vpack.c.b16 %v590, %v589
        %v604 = vpack.c.b16 %v592, %v591
        %v605 = vpack.c.b16 %v594, %v593
        %v606 = vpack.c.b16 %v596, %v595
        %v607 = vpack.c.b16 %v598, %v597
        %v608 = vpack.c.b16 %v600, %v599
        %v633 = vunpack.c.l.b16 %v553
        %v634 = vunpack.c.l.b16 %v554
        %v635 = vunpack.c.l.b16 %v555
        %v636 = vunpack.c.l.b16 %v556
        %v637 = vunpack.c.l.b16 %v557
        %v638 = vunpack.c.l.b16 %v558
        %v639 = vunpack.c.l.b16 %v559
        %v640 = vunpack.c.l.b16 %v560
        %v641 = vunpack.c.l.b16 %v561
        %v642 = vunpack.c.l.b16 %v562
        %v643 = vunpack.c.l.b16 %v563
        %v644 = vunpack.c.l.b16 %v564
        %v645 = vunpack.c.l.b16 %v565
        %v646 = vunpack.c.l.b16 %v566
        %v647 = vunpack.c.l.b16 %v567
        %v648 = vunpack.c.l.b16 %v568
        %v649 = vpack.c.b16 %v634, %v633
        %v650 = vpack.c.b16 %v636, %v635
        %v651 = vpack.c.b16 %v638, %v637
        %v652 = vpack.c.b16 %v640, %v639
        %v653 = vpack.c.b16 %v642, %v641
        %v654 = vpack.c.b16 %v644, %v643
        %v655 = vpack.c.b16 %v646, %v645
        %v656 = vpack.c.b16 %v648, %v647
        %665 = vmatprep.subr.bf16.mxu0 0
        %666 = vmatpush1.bf16.msra.mxu0 %v649
        %667 = vmatprep.subr.bf16.mxu0 0
        %668 = vmatpush1.bf16.msra.mxu0 %v650
        %669 = vmatprep.subr.bf16.mxu0 0
        %670 = vmatpush1.bf16.msra.mxu0 %v651
        %671 = vmatprep.subr.bf16.mxu0 0
        %672 = vmatpush1.bf16.msra.mxu0 %v652
        %673 = vmatprep.subr.bf16.mxu0 0
        %674 = vmatpush1.bf16.msra.mxu0 %v653
        %675 = vmatprep.subr.bf16.mxu0 0
        %676 = vmatpush1.bf16.msra.mxu0 %v654
        %677 = vmatprep.subr.bf16.mxu0 0
        %678 = vmatpush1.bf16.msra.mxu0 %v655
        %679 = vmatprep.subr.bf16.mxu0 0
        %680 = vmatpush1.bf16.msra.mxu0 %v656
        %681 = vmatprep.subr.bf16.mxu0 0
        %682 = vmatpush1.bf16.msra.mxu0 0
        %683 = vmatprep.subr.bf16.mxu0 0
        %684 = vmatpush1.bf16.msra.mxu0 0
        %685 = vmatprep.subr.bf16.mxu0 0
        %686 = vmatpush1.bf16.msra.mxu0 0
        %687 = vmatprep.subr.bf16.mxu0 0
        %688 = vmatpush1.bf16.msra.mxu0 0
        %689 = vmatprep.subr.bf16.mxu0 0
        %690 = vmatpush1.bf16.msra.mxu0 0
        %691 = vmatprep.subr.bf16.mxu0 0
        %692 = vmatpush1.bf16.msra.mxu0 0
        %693 = vmatprep.subr.bf16.mxu0 0
        %694 = vmatpush1.bf16.msra.mxu0 0
        %695 = vmatprep.subr.bf16.mxu0 0
        %696 = vmatpush1.bf16.msra.mxu0 0
        %697 = vmatprep.mubr.bf16.mxu0 0
        %698 = vmatmul.mubr.bf16.gmra.mrb[0].mxu0 %v601
        %v699 = vpop.f32.mrb[0].mxu0
        %v700 = vadd.f32 0.0, %v699
        %v701 = vpop.f32.mrb[0].mxu0
        %v702 = vpop.f32.mrb[0].mxu0
        %v703 = vadd.f32 0.0, %v702
        %v704 = vpop.f32.mrb[0].mxu0
        %705 = vmatprep.mubr.bf16.mxu0 0
        %706 = vmatmul.mubr.bf16.gmra.mrb[0].mxu0 %v602
        %v707 = vpop.f32.mrb[0].mxu0
        %v708 = vadd.f32 0.0, %v707
        %v709 = vpop.f32.mrb[0].mxu0
        %v710 = vpop.f32.mrb[0].mxu0
        %v711 = vadd.f32 0.0, %v710
        %v712 = vpop.f32.mrb[0].mxu0
        %713 = vmatprep.mubr.bf16.mxu0 0
        %714 = vmatmul.mubr.bf16.gmra.mrb[0].mxu0 %v603
        %v715 = vpop.f32.mrb[0].mxu0
        %v716 = vadd.f32 0.0, %v715
        %v717 = vpop.f32.mrb[0].mxu0
        %v718 = vpop.f32.mrb[0].mxu0
        %v719 = vadd.f32 0.0, %v718
        %v720 = vpop.f32.mrb[0].mxu0
        %721 = vmatprep.mubr.bf16.mxu0 0
        %722 = vmatmul.mubr.bf16.gmra.mrb[0].mxu0 %v604
        %v723 = vpop.f32.mrb[0].mxu0
        %v724 = vadd.f32 0.0, %v723
        %v725 = vpop.f32.mrb[0].mxu0
        %v726 = vpop.f32.mrb[0].mxu0
        %v727 = vadd.f32 0.0, %v726
        %v728 = vpop.f32.mrb[0].mxu0
        %729 = vmatprep.mubr.bf16.mxu0 0
        %730 = vmatmul.mubr.bf16.gmra.mrb[0].mxu0 %v605
        %v731 = vpop.f32.mrb[0].mxu0
        %v732 = vadd.f32 0.0, %v731
        %v733 = vpop.f32.mrb[0].mxu0
        %v734 = vpop.f32.mrb[0].mxu0
        %v735 = vadd.f32 0.0, %v734
        %v736 = vpop.f32.mrb[0].mxu0
        %737 = vmatprep.mubr.bf16.mxu0 0
        %738 = vmatmul.mubr.bf16.gmra.mrb[0].mxu0 %v606
        %v739 = vpop.f32.mrb[0].mxu0
        %v740 = vadd.f32 0.0, %v739
        %v741 = vpop.f32.mrb[0].mxu0
        %v742 = vpop.f32.mrb[0].mxu0
        %v743 = vadd.f32 0.0, %v742
        %v744 = vpop.f32.mrb[0].mxu0
        %745 = vmatprep.mubr.bf16.mxu0 0
        %746 = vmatmul.mubr.bf16.gmra.mrb[0].mxu0 %v607
        %v747 = vpop.f32.mrb[0].mxu0
        %v748 = vadd.f32 0.0, %v747
        %v749 = vpop.f32.mrb[0].mxu0
        %v750 = vpop.f32.mrb[0].mxu0
        %v751 = vadd.f32 0.0, %v750
        %v752 = vpop.f32.mrb[0].mxu0
        %753 = vmatprep.mubr.bf16.mxu0 0
        %754 = vmatmul.mubr.bf16.gmra.mrb[0].mxu0 %v608
        %v755 = vpop.f32.mrb[0].mxu0
        %v756 = vadd.f32 0.0, %v755
        %v757 = vpop.f32.mrb[0].mxu0
        %v758 = vpop.f32.mrb[0].mxu0
        %v759 = vadd.f32 0.0, %v758
        %v760 = vpop.f32.mrb[0].mxu0
        %761 = vdwg.mxu0
        %v762 = vadd.f32 %v521, %v700
        %v763 = vadd.f32 %v522, %v703
        %v764 = vadd.f32 %v523, %v708
        %v765 = vadd.f32 %v524, %v711
        %v766 = vadd.f32 %v525, %v716
        %v767 = vadd.f32 %v526, %v719
        %v768 = vadd.f32 %v527, %v724
        %v769 = vadd.f32 %v528, %v727
        %v770 = vadd.f32 %v529, %v732
        %v771 = vadd.f32 %v530, %v735
        %v772 = vadd.f32 %v531, %v740
        %v773 = vadd.f32 %v532, %v743
        %v774 = vadd.f32 %v533, %v748
        %v775 = vadd.f32 %v534, %v751
        %v776 = vadd.f32 %v535, %v756
        %v777 = vadd.f32 %v536, %v759
        %vm778 = vcmask 130048
        %779 = vst.msk [vmem:[#allocation2] sm:$0xff] %vm778, %v762
        %780 = vst.msk [vmem:[#allocation2 + $0x8] sm:$0xff] %vm778, %v763
        %781 = vst.msk [vmem:[#allocation2 + $0x10] sm:$0xff] %vm778, %v764
        %782 = vst.msk [vmem:[#allocation2 + $0x18] sm:$0xff] %vm778, %v765
        %783 = vst.msk [vmem:[#allocation2 + $0x20] sm:$0xff] %vm778, %v766
        %784 = vst.msk [vmem:[#allocation2 + $0x28] sm:$0xff] %vm778, %v767
        %785 = vst.msk [vmem:[#allocation2 + $0x30] sm:$0xff] %vm778, %v768
        %786 = vst.msk [vmem:[#allocation2 + $0x38] sm:$0xff] %vm778, %v769
        %787 = vst.msk [vmem:[#allocation2 + $0x40] sm:$0xff] %vm778, %v770
        %788 = vst.msk [vmem:[#allocation2 + $0x48] sm:$0xff] %vm778, %v771
        %789 = vst.msk [vmem:[#allocation2 + $0x50] sm:$0xff] %vm778, %v772
        %790 = vst.msk [vmem:[#allocation2 + $0x58] sm:$0xff] %vm778, %v773
        %791 = vst.msk [vmem:[#allocation2 + $0x60] sm:$0xff] %vm778, %v774
        %792 = vst.msk [vmem:[#allocation2 + $0x68] sm:$0xff] %vm778, %v775
        %793 = vst.msk [vmem:[#allocation2 + $0x70] sm:$0xff] %vm778, %v776
        %794 = vst.msk [vmem:[#allocation2 + $0x78] sm:$0xff] %vm778, %v777
        %p795 = scmp.eq.s32.totalorder %s32, 1
        // Predicated region
        $region94: #{tpu_custom_call.1} parent=80 // pred_check
          %p796 = pneg %p795
        $region95: #{tpu_custom_call.1} parent=80 // pred_check_branch
          %798 = sbr.rel (%p796) target = $region97
        $region96: #{tpu_custom_call.1} parent=80 // pred_region
          %v799 = vld [vmem:[#allocation2] sm:$0xff]
          %v800 = vld [vmem:[#allocation2 + $0x8] sm:$0xff]
          %v801 = vld [vmem:[#allocation2 + $0x10] sm:$0xff]
          %v802 = vld [vmem:[#allocation2 + $0x18] sm:$0xff]
          %v803 = vld [vmem:[#allocation2 + $0x20] sm:$0xff]
          %v804 = vld [vmem:[#allocation2 + $0x28] sm:$0xff]
          %v805 = vld [vmem:[#allocation2 + $0x30] sm:$0xff]
          %v806 = vld [vmem:[#allocation2 + $0x38] sm:$0xff]
          %v807 = vld [vmem:[#allocation2 + $0x40] sm:$0xff]
          %v808 = vld [vmem:[#allocation2 + $0x48] sm:$0xff]
          %v809 = vld [vmem:[#allocation2 + $0x50] sm:$0xff]
          %v810 = vld [vmem:[#allocation2 + $0x58] sm:$0xff]
          %v811 = vld [vmem:[#allocation2 + $0x60] sm:$0xff]
          %v812 = vld [vmem:[#allocation2 + $0x68] sm:$0xff]
          %v813 = vld [vmem:[#allocation2 + $0x70] sm:$0xff]
          %v814 = vld [vmem:[#allocation2 + $0x78] sm:$0xff]
          %v815 = vld [vmem:[%s496] sm:$0xf]
          %v816 = vld [vmem:[%s496 + $0x4] sm:$0xf]
          %v817 = vld [vmem:[%s496 + $0x8] sm:$0xf]
          %v818 = vld [vmem:[%s496 + $0xc] sm:$0xf]
          %v819 = vld [vmem:[%s496 + $0x10] sm:$0xf]
          %v820 = vld [vmem:[%s496 + $0x14] sm:$0xf]
          %v821 = vld [vmem:[%s496 + $0x18] sm:$0xf]
          %v822 = vld [vmem:[%s496 + $0x1c] sm:$0xf]
          %v823 = vld [vmem:[%s496 + $0x20] sm:$0xf]
          %v824 = vld [vmem:[%s496 + $0x24] sm:$0xf]
          %v825 = vld [vmem:[%s496 + $0x28] sm:$0xf]
          %v826 = vld [vmem:[%s496 + $0x2c] sm:$0xf]
          %v827 = vld [vmem:[%s496 + $0x30] sm:$0xf]
          %v828 = vld [vmem:[%s496 + $0x34] sm:$0xf]
          %v829 = vld [vmem:[%s496 + $0x38] sm:$0xf]
          %v830 = vld [vmem:[%s496 + $0x3c] sm:$0xf]
          %v831 = vunpack.c.l.bf16 %v815
          %v832 = vunpack.c.l.bf16 %v816
          %v833 = vunpack.c.l.bf16 %v817
          %v834 = vunpack.c.l.bf16 %v818
          %v835 = vunpack.c.l.bf16 %v819
          %v836 = vunpack.c.l.bf16 %v820
          %v837 = vunpack.c.l.bf16 %v821
          %v838 = vunpack.c.l.bf16 %v822
          %v839 = vunpack.c.l.bf16 %v823
          %v840 = vunpack.c.l.bf16 %v824
          %v841 = vunpack.c.l.bf16 %v825
          %v842 = vunpack.c.l.bf16 %v826
          %v843 = vunpack.c.l.bf16 %v827
          %v844 = vunpack.c.l.bf16 %v828
          %v845 = vunpack.c.l.bf16 %v829
          %v846 = vunpack.c.l.bf16 %v830
          %v847 = vld [vmem:[%s3] sm:$0xff]
          %v848 = vld [vmem:[%s3 + $0x8] sm:$0xff]
          %v849 = vld [vmem:[#allocation4] sm:$0xff]
          %v850 = vld [vmem:[#allocation4 + $0x8] sm:$0xff]
          %v852 = vsel %vm778, %v831, 0
          %v855 = vsel %vm778, %v832, 0
          %v858 = vsel %vm778, %v833, 0
          %v861 = vsel %vm778, %v834, 0
          %v864 = vsel %vm778, %v835, 0
          %v867 = vsel %vm778, %v836, 0
          %v870 = vsel %vm778, %v837, 0
          %v873 = vsel %vm778, %v838, 0
          %v876 = vsel %vm778, %v839, 0
          %v879 = vsel %vm778, %v840, 0
          %v882 = vsel %vm778, %v841, 0
          %v885 = vsel %vm778, %v842, 0
          %v888 = vsel %vm778, %v843, 0
          %v891 = vsel %vm778, %v844, 0
          %v894 = vsel %vm778, %v845, 0
          %v897 = vsel %vm778, %v846, 0
          %899 = vmatprep.subr.mxu0 0.0
          %900 = vmatpush1.msra.mxu0 %v849
          %901 = vmatprep.subr.mxu0 0.0
          %902 = vmatpush1.msra.mxu0 %v850
          %903 = vmatprep.subr.mxu0 0.0
          %904 = vmatpush1.msra.mxu0 0.0
          %905 = vmatprep.subr.mxu0 0.0
          %906 = vmatpush1.msra.mxu0 0.0
          %907 = vmatprep.subr.mxu0 0.0
          %908 = vmatpush1.msra.mxu0 0.0
          %909 = vmatprep.subr.mxu0 0.0
          %910 = vmatpush1.msra.mxu0 0.0
          %911 = vmatprep.subr.mxu0 0.0
          %912 = vmatpush1.msra.mxu0 0.0
          %913 = vmatprep.subr.mxu0 0.0
          %914 = vmatpush1.msra.mxu0 0.0
          %915 = vmatprep.subr.mxu0 0.0
          %916 = vmatpush1.msra.mxu0 0.0
          %917 = vmatprep.subr.mxu0 0.0
          %918 = vmatpush1.msra.mxu0 0.0
          %919 = vmatprep.subr.mxu0 0.0
          %920 = vmatpush1.msra.mxu0 0.0
          %921 = vmatprep.subr.mxu0 0.0
          %922 = vmatpush1.msra.mxu0 0.0
          %923 = vmatprep.subr.mxu0 0.0
          %924 = vmatpush1.msra.mxu0 0.0
          %925 = vmatprep.subr.mxu0 0.0
          %926 = vmatpush1.msra.mxu0 0.0
          %927 = vmatprep.subr.mxu0 0.0
          %928 = vmatpush1.msra.mxu0 0.0
          %929 = vmatprep.subr.mxu0 0.0
          %930 = vmatpush1.msra.mxu0 0.0
          %931 = vmatprep.subr.mxu0 0.0
          %932 = vmatpush1.msra.mxu0 0.0
          %933 = vmatprep.subr.mxu0 0.0
          %934 = vmatpush1.msra.mxu0 0.0
          %935 = vmatprep.subr.mxu0 0.0
          %936 = vmatpush1.msra.mxu0 0.0
          %937 = vmatprep.subr.mxu0 0.0
          %938 = vmatpush1.msra.mxu0 0.0
          %939 = vmatprep.subr.mxu0 0.0
          %940 = vmatpush1.msra.mxu0 0.0
          %941 = vmatprep.subr.mxu0 0.0
          %942 = vmatpush1.msra.mxu0 0.0
          %943 = vmatprep.subr.mxu0 0.0
          %944 = vmatpush1.msra.mxu0 0.0
          %945 = vmatprep.subr.mxu0 0.0
          %946 = vmatpush1.msra.mxu0 0.0
          %947 = vmatprep.subr.mxu0 0.0
          %948 = vmatpush1.msra.mxu0 0.0
          %949 = vmatprep.subr.mxu0 0.0
          %950 = vmatpush1.msra.mxu0 0.0
          %951 = vmatprep.subr.mxu0 0.0
          %952 = vmatpush1.msra.mxu0 0.0
          %953 = vmatprep.subr.mxu0 0.0
          %954 = vmatpush1.msra.mxu0 0.0
          %955 = vmatprep.subr.mxu0 0.0
          %956 = vmatpush1.msra.mxu0 0.0
          %957 = vmatprep.subr.mxu0 0.0
          %958 = vmatpush1.msra.mxu0 0.0
          %959 = vmatprep.subr.mxu0 0.0
          %960 = vmatpush1.msra.mxu0 0.0
          %961 = vmatprep.subr.mxu0 0.0
          %962 = vmatpush1.msra.mxu0 0.0
          %963 = vmatprep.mubr.f32.mxu0 0.0
          %964 = vmatmul.mubr.f32.gmra.mrb[0].mxu0 %v852
          %v965 = vpop.f32.mrb[0].mxu0
          %v966 = vadd.f32 0.0, %v965
          %v967 = vpop.f32.mrb[0].mxu0
          %968 = vmatprep.mubr.f32.mxu0 0.0
          %969 = vmatmul.mubr.f32.gmra.mrb[0].mxu0 %v855
          %v970 = vpop.f32.mrb[0].mxu0
          %v971 = vadd.f32 0.0, %v970
          %v972 = vpop.f32.mrb[0].mxu0
          %973 = vmatprep.mubr.f32.mxu0 0.0
          %974 = vmatmul.mubr.f32.gmra.mrb[0].mxu0 %v858
          %v975 = vpop.f32.mrb[0].mxu0
          %v976 = vadd.f32 0.0, %v975
          %v977 = vpop.f32.mrb[0].mxu0
          %978 = vmatprep.mubr.f32.mxu0 0.0
          %979 = vmatmul.mubr.f32.gmra.mrb[0].mxu0 %v861
          %v980 = vpop.f32.mrb[0].mxu0
          %v981 = vadd.f32 0.0, %v980
          %v982 = vpop.f32.mrb[0].mxu0
          %983 = vmatprep.mubr.f32.mxu0 0.0
          %984 = vmatmul.mubr.f32.gmra.mrb[0].mxu0 %v864
          %v985 = vpop.f32.mrb[0].mxu0
          %v986 = vadd.f32 0.0, %v985
          %v987 = vpop.f32.mrb[0].mxu0
          %988 = vmatprep.mubr.f32.mxu0 0.0
          %989 = vmatmul.mubr.f32.gmra.mrb[0].mxu0 %v867
          %v990 = vpop.f32.mrb[0].mxu0
          %v991 = vadd.f32 0.0, %v990
          %v992 = vpop.f32.mrb[0].mxu0
          %993 = vmatprep.mubr.f32.mxu0 0.0
          %994 = vmatmul.mubr.f32.gmra.mrb[0].mxu0 %v870
          %v995 = vpop.f32.mrb[0].mxu0
          %v996 = vadd.f32 0.0, %v995
          %v997 = vpop.f32.mrb[0].mxu0
          %998 = vmatprep.mubr.f32.mxu0 0.0
          %999 = vmatmul.mubr.f32.gmra.mrb[0].mxu0 %v873
          %v1000 = vpop.f32.mrb[0].mxu0
          %v1001 = vadd.f32 0.0, %v1000
          %v1002 = vpop.f32.mrb[0].mxu0
          %1003 = vmatprep.mubr.f32.mxu0 0.0
          %1004 = vmatmul.mubr.f32.gmra.mrb[0].mxu0 %v876
          %v1005 = vpop.f32.mrb[0].mxu0
          %v1006 = vadd.f32 0.0, %v1005
          %v1007 = vpop.f32.mrb[0].mxu0
          %1008 = vmatprep.mubr.f32.mxu0 0.0
          %1009 = vmatmul.mubr.f32.gmra.mrb[0].mxu0 %v879
          %v1010 = vpop.f32.mrb[0].mxu0
          %v1011 = vadd.f32 0.0, %v1010
          %v1012 = vpop.f32.mrb[0].mxu0
          %1013 = vmatprep.mubr.f32.mxu0 0.0
          %1014 = vmatmul.mubr.f32.gmra.mrb[0].mxu0 %v882
          %v1015 = vpop.f32.mrb[0].mxu0
          %v1016 = vadd.f32 0.0, %v1015
          %v1017 = vpop.f32.mrb[0].mxu0
          %1018 = vmatprep.mubr.f32.mxu0 0.0
          %1019 = vmatmul.mubr.f32.gmra.mrb[0].mxu0 %v885
          %v1020 = vpop.f32.mrb[0].mxu0
          %v1021 = vadd.f32 0.0, %v1020
          %v1022 = vpop.f32.mrb[0].mxu0
          %1023 = vmatprep.mubr.f32.mxu0 0.0
          %1024 = vmatmul.mubr.f32.gmra.mrb[0].mxu0 %v888
          %v1025 = vpop.f32.mrb[0].mxu0
          %v1026 = vadd.f32 0.0, %v1025
          %v1027 = vpop.f32.mrb[0].mxu0
          %1028 = vmatprep.mubr.f32.mxu0 0.0
          %1029 = vmatmul.mubr.f32.gmra.mrb[0].mxu0 %v891
          %v1030 = vpop.f32.mrb[0].mxu0
          %v1031 = vadd.f32 0.0, %v1030
          %v1032 = vpop.f32.mrb[0].mxu0
          %1033 = vmatprep.mubr.f32.mxu0 0.0
          %1034 = vmatmul.mubr.f32.gmra.mrb[0].mxu0 %v894
          %v1035 = vpop.f32.mrb[0].mxu0
          %v1036 = vadd.f32 0.0, %v1035
          %v1037 = vpop.f32.mrb[0].mxu0
          %1038 = vmatprep.mubr.f32.mxu0 0.0
          %1039 = vmatmul.mubr.f32.gmra.mrb[0].mxu0 %v897
          %v1040 = vpop.f32.mrb[0].mxu0
          %v1041 = vadd.f32 0.0, %v1040
          %v1042 = vpop.f32.mrb[0].mxu0
          %1043 = vdwg.mxu0
          %v1045 = vsel %vm778, %v799, 0
          %v1048 = vsel %vm778, %v800, 0
          %v1051 = vsel %vm778, %v801, 0
          %v1054 = vsel %vm778, %v802, 0
          %v1057 = vsel %vm778, %v803, 0
          %v1060 = vsel %vm778, %v804, 0
          %v1063 = vsel %vm778, %v805, 0
          %v1066 = vsel %vm778, %v806, 0
          %v1069 = vsel %vm778, %v807, 0
          %v1072 = vsel %vm778, %v808, 0
          %v1075 = vsel %vm778, %v809, 0
          %v1078 = vsel %vm778, %v810, 0
          %v1081 = vsel %vm778, %v811, 0
          %v1084 = vsel %vm778, %v812, 0
          %v1087 = vsel %vm778, %v813, 0
          %v1090 = vsel %vm778, %v814, 0
          %1092 = vmatprep.subr.mxu0 0.0
          %1093 = vmatpush1.msra.mxu0 %v847
          %1094 = vmatprep.subr.mxu0 0.0
          %1095 = vmatpush1.msra.mxu0 %v848
          %1096 = vmatprep.subr.mxu0 0.0
          %1097 = vmatpush1.msra.mxu0 0.0
          %1098 = vmatprep.subr.mxu0 0.0
          %1099 = vmatpush1.msra.mxu0 0.0
          %1100 = vmatprep.subr.mxu0 0.0
          %1101 = vmatpush1.msra.mxu0 0.0
          %1102 = vmatprep.subr.mxu0 0.0
          %1103 = vmatpush1.msra.mxu0 0.0
          %1104 = vmatprep.subr.mxu0 0.0
          %1105 = vmatpush1.msra.mxu0 0.0
          %1106 = vmatprep.subr.mxu0 0.0
          %1107 = vmatpush1.msra.mxu0 0.0
          %1108 = vmatprep.subr.mxu0 0.0
          %1109 = vmatpush1.msra.mxu0 0.0
          %1110 = vmatprep.subr.mxu0 0.0
          %1111 = vmatpush1.msra.mxu0 0.0
          %1112 = vmatprep.subr.mxu0 0.0
          %1113 = vmatpush1.msra.mxu0 0.0
          %1114 = vmatprep.subr.mxu0 0.0
          %1115 = vmatpush1.msra.mxu0 0.0
          %1116 = vmatprep.subr.mxu0 0.0
          %1117 = vmatpush1.msra.mxu0 0.0
          %1118 = vmatprep.subr.mxu0 0.0
          %1119 = vmatpush1.msra.mxu0 0.0
          %1120 = vmatprep.subr.mxu0 0.0
          %1121 = vmatpush1.msra.mxu0 0.0
          %1122 = vmatprep.subr.mxu0 0.0
          %1123 = vmatpush1.msra.mxu0 0.0
          %1124 = vmatprep.subr.mxu0 0.0
          %1125 = vmatpush1.msra.mxu0 0.0
          %1126 = vmatprep.subr.mxu0 0.0
          %1127 = vmatpush1.msra.mxu0 0.0
          %1128 = vmatprep.subr.mxu0 0.0
          %1129 = vmatpush1.msra.mxu0 0.0
          %1130 = vmatprep.subr.mxu0 0.0
          %1131 = vmatpush1.msra.mxu0 0.0
          %1132 = vmatprep.subr.mxu0 0.0
          %1133 = vmatpush1.msra.mxu0 0.0
          %1134 = vmatprep.subr.mxu0 0.0
          %1135 = vmatpush1.msra.mxu0 0.0
          %1136 = vmatprep.subr.mxu0 0.0
          %1137 = vmatpush1.msra.mxu0 0.0
          %1138 = vmatprep.subr.mxu0 0.0
          %1139 = vmatpush1.msra.mxu0 0.0
          %1140 = vmatprep.subr.mxu0 0.0
          %1141 = vmatpush1.msra.mxu0 0.0
          %1142 = vmatprep.subr.mxu0 0.0
          %1143 = vmatpush1.msra.mxu0 0.0
          %1144 = vmatprep.subr.mxu0 0.0
          %1145 = vmatpush1.msra.mxu0 0.0
          %1146 = vmatprep.subr.mxu0 0.0
          %1147 = vmatpush1.msra.mxu0 0.0
          %1148 = vmatprep.subr.mxu0 0.0
          %1149 = vmatpush1.msra.mxu0 0.0
          %1150 = vmatprep.subr.mxu0 0.0
          %1151 = vmatpush1.msra.mxu0 0.0
          %1152 = vmatprep.subr.mxu0 0.0
          %1153 = vmatpush1.msra.mxu0 0.0
          %1154 = vmatprep.subr.mxu0 0.0
          %1155 = vmatpush1.msra.mxu0 0.0
          %1156 = vmatprep.mubr.f32.mxu0 0.0
          %1157 = vmatmul.mubr.f32.gmra.mrb[0].mxu0 %v1045
          %v1158 = vpop.f32.mrb[0].mxu0
          %v1159 = vadd.f32 %v966, %v1158
          %v1160 = vpop.f32.mrb[0].mxu0
          %1161 = vmatprep.mubr.f32.mxu0 0.0
          %1162 = vmatmul.mubr.f32.gmra.mrb[0].mxu0 %v1048
          %v1163 = vpop.f32.mrb[0].mxu0
          %v1164 = vadd.f32 %v971, %v1163
          %v1165 = vpop.f32.mrb[0].mxu0
          %1166 = vmatprep.mubr.f32.mxu0 0.0
          %1167 = vmatmul.mubr.f32.gmra.mrb[0].mxu0 %v1051
          %v1168 = vpop.f32.mrb[0].mxu0
          %v1169 = vadd.f32 %v976, %v1168
          %v1170 = vpop.f32.mrb[0].mxu0
          %1171 = vmatprep.mubr.f32.mxu0 0.0
          %1172 = vmatmul.mubr.f32.gmra.mrb[0].mxu0 %v1054
          %v1173 = vpop.f32.mrb[0].mxu0
          %v1174 = vadd.f32 %v981, %v1173
          %v1175 = vpop.f32.mrb[0].mxu0
          %1176 = vmatprep.mubr.f32.mxu0 0.0
          %1177 = vmatmul.mubr.f32.gmra.mrb[0].mxu0 %v1057
          %v1178 = vpop.f32.mrb[0].mxu0
          %v1179 = vadd.f32 %v986, %v1178
          %v1180 = vpop.f32.mrb[0].mxu0
          %1181 = vmatprep.mubr.f32.mxu0 0.0
          %1182 = vmatmul.mubr.f32.gmra.mrb[0].mxu0 %v1060
          %v1183 = vpop.f32.mrb[0].mxu0
          %v1184 = vadd.f32 %v991, %v1183
          %v1185 = vpop.f32.mrb[0].mxu0
          %1186 = vmatprep.mubr.f32.mxu0 0.0
          %1187 = vmatmul.mubr.f32.gmra.mrb[0].mxu0 %v1063
          %v1188 = vpop.f32.mrb[0].mxu0
          %v1189 = vadd.f32 %v996, %v1188
          %v1190 = vpop.f32.mrb[0].mxu0
          %1191 = vmatprep.mubr.f32.mxu0 0.0
          %1192 = vmatmul.mubr.f32.gmra.mrb[0].mxu0 %v1066
          %v1193 = vpop.f32.mrb[0].mxu0
          %v1194 = vadd.f32 %v1001, %v1193
          %v1195 = vpop.f32.mrb[0].mxu0
          %1196 = vmatprep.mubr.f32.mxu0 0.0
          %1197 = vmatmul.mubr.f32.gmra.mrb[0].mxu0 %v1069
          %v1198 = vpop.f32.mrb[0].mxu0
          %v1199 = vadd.f32 %v1006, %v1198
          %v1200 = vpop.f32.mrb[0].mxu0
          %1201 = vmatprep.mubr.f32.mxu0 0.0
          %1202 = vmatmul.mubr.f32.gmra.mrb[0].mxu0 %v1072
          %v1203 = vpop.f32.mrb[0].mxu0
          %v1204 = vadd.f32 %v1011, %v1203
          %v1205 = vpop.f32.mrb[0].mxu0
          %1206 = vmatprep.mubr.f32.mxu0 0.0
          %1207 = vmatmul.mubr.f32.gmra.mrb[0].mxu0 %v1075
          %v1208 = vpop.f32.mrb[0].mxu0
          %v1209 = vadd.f32 %v1016, %v1208
          %v1210 = vpop.f32.mrb[0].mxu0
          %1211 = vmatprep.mubr.f32.mxu0 0.0
          %1212 = vmatmul.mubr.f32.gmra.mrb[0].mxu0 %v1078
          %v1213 = vpop.f32.mrb[0].mxu0
          %v1214 = vadd.f32 %v1021, %v1213
          %v1215 = vpop.f32.mrb[0].mxu0
          %1216 = vmatprep.mubr.f32.mxu0 0.0
          %1217 = vmatmul.mubr.f32.gmra.mrb[0].mxu0 %v1081
          %v1218 = vpop.f32.mrb[0].mxu0
          %v1219 = vadd.f32 %v1026, %v1218
          %v1220 = vpop.f32.mrb[0].mxu0
          %1221 = vmatprep.mubr.f32.mxu0 0.0
          %1222 = vmatmul.mubr.f32.gmra.mrb[0].mxu0 %v1084
          %v1223 = vpop.f32.mrb[0].mxu0
          %v1224 = vadd.f32 %v1031, %v1223
          %v1225 = vpop.f32.mrb[0].mxu0
          %1226 = vmatprep.mubr.f32.mxu0 0.0
          %1227 = vmatmul.mubr.f32.gmra.mrb[0].mxu0 %v1087
          %v1228 = vpop.f32.mrb[0].mxu0
          %v1229 = vadd.f32 %v1036, %v1228
          %v1230 = vpop.f32.mrb[0].mxu0
          %1231 = vmatprep.mubr.f32.mxu0 0.0
          %1232 = vmatmul.mubr.f32.gmra.mrb[0].mxu0 %v1090
          %v1233 = vpop.f32.mrb[0].mxu0
          %v1234 = vadd.f32 %v1041, %v1233
          %v1235 = vpop.f32.mrb[0].mxu0
          %1236 = vdwg.mxu0
          %v1237 = vld [vmem:[%s5] sm:$0x1]
          %v1239 = vlaneseq
          %v1240 = vshrl.u32 %v1239, 7
          %v1241 = vsub.s32 0, %v1240
          %v1242 = vrot.slane %v1237, %v1241
          %v1244 = vadd.f32 %v1159, %v1242
          %v1245 = vadd.f32 %v1164, %v1242
          %v1246 = vadd.f32 %v1169, %v1242
          %v1247 = vadd.f32 %v1174, %v1242
          %v1248 = vadd.f32 %v1179, %v1242
          %v1249 = vadd.f32 %v1184, %v1242
          %v1250 = vadd.f32 %v1189, %v1242
          %v1251 = vadd.f32 %v1194, %v1242
          %v1252 = vadd.f32 %v1199, %v1242
          %v1253 = vadd.f32 %v1204, %v1242
          %v1254 = vadd.f32 %v1209, %v1242
          %v1255 = vadd.f32 %v1214, %v1242
          %v1256 = vadd.f32 %v1219, %v1242
          %v1257 = vadd.f32 %v1224, %v1242
          %v1258 = vadd.f32 %v1229, %v1242
          %v1259 = vadd.f32 %v1234, %v1242
          %1260 = vst [vmem:[%s472] sm:$0xff] %v1244
          %1261 = vst [vmem:[%s472 + $0x8] sm:$0xff] %v1245
          %1262 = vst [vmem:[%s472 + $0x10] sm:$0xff] %v1246
          %1263 = vst [vmem:[%s472 + $0x18] sm:$0xff] %v1247
          %1264 = vst [vmem:[%s472 + $0x20] sm:$0xff] %v1248
          %1265 = vst [vmem:[%s472 + $0x28] sm:$0xff] %v1249
          %1266 = vst [vmem:[%s472 + $0x30] sm:$0xff] %v1250
          %1267 = vst [vmem:[%s472 + $0x38] sm:$0xff] %v1251
          %1268 = vst [vmem:[%s472 + $0x40] sm:$0xff] %v1252
          %1269 = vst [vmem:[%s472 + $0x48] sm:$0xff] %v1253
          %1270 = vst [vmem:[%s472 + $0x50] sm:$0xff] %v1254
          %1271 = vst [vmem:[%s472 + $0x58] sm:$0xff] %v1255
          %1272 = vst [vmem:[%s472 + $0x60] sm:$0xff] %v1256
          %1273 = vst [vmem:[%s472 + $0x68] sm:$0xff] %v1257
          %1274 = vst [vmem:[%s472 + $0x70] sm:$0xff] %v1258
          %1275 = vst [vmem:[%s472 + $0x78] sm:$0xff] %v1259
          %v1276 = vadd.f32 %v1244, %v1245
          %v1277 = vadd.f32 %v1276, %v1246
          %v1278 = vadd.f32 %v1277, %v1247
          %v1279 = vadd.f32 %v1278, %v1248
          %v1280 = vadd.f32 %v1279, %v1249
          %v1281 = vadd.f32 %v1280, %v1250
          %v1282 = vadd.f32 %v1281, %v1251
          %v1283 = vadd.f32 %v1282, %v1252
          %v1284 = vadd.f32 %v1283, %v1253
          %v1285 = vadd.f32 %v1284, %v1254
          %v1286 = vadd.f32 %v1285, %v1255
          %v1287 = vadd.f32 %v1286, %v1256
          %v1288 = vadd.f32 %v1287, %v1257
          %v1289 = vadd.f32 %v1288, %v1258
          %v1290 = vadd.f32 %v1289, %v1259
          %v1291 = vrot.slane %v1290, 4
          %v1292 = vadd.f32 %v1290, %v1291
          %v1293 = vrot.slane %v1292, 2
          %v1294 = vadd.f32 %v1292, %v1293
          %v1295 = vrot.slane %v1294, 1
          %v1296 = vadd.f32 %v1294, %v1295
          %1297 = vst [vmem:[%s478] sm:$0x1] %v1296
          %v1298 = vmul.f32 %v1244, %v1244
          %v1299 = vmul.f32 %v1245, %v1245
          %v1300 = vmul.f32 %v1246, %v1246
          %v1301 = vmul.f32 %v1247, %v1247
          %v1302 = vmul.f32 %v1248, %v1248
          %v1303 = vmul.f32 %v1249, %v1249
          %v1304 = vmul.f32 %v1250, %v1250
          %v1305 = vmul.f32 %v1251, %v1251
          %v1306 = vmul.f32 %v1252, %v1252
          %v1307 = vmul.f32 %v1253, %v1253
          %v1308 = vmul.f32 %v1254, %v1254
          %v1309 = vmul.f32 %v1255, %v1255
          %v1310 = vmul.f32 %v1256, %v1256
          %v1311 = vmul.f32 %v1257, %v1257
          %v1312 = vmul.f32 %v1258, %v1258
          %v1313 = vmul.f32 %v1259, %v1259
          %v1314 = vadd.f32 %v1298, %v1299
          %v1315 = vadd.f32 %v1314, %v1300
          %v1316 = vadd.f32 %v1315, %v1301
          %v1317 = vadd.f32 %v1316, %v1302
          %v1318 = vadd.f32 %v1317, %v1303
          %v1319 = vadd.f32 %v1318, %v1304
          %v1320 = vadd.f32 %v1319, %v1305
          %v1321 = vadd.f32 %v1320, %v1306
          %v1322 = vadd.f32 %v1321, %v1307
          %v1323 = vadd.f32 %v1322, %v1308
          %v1324 = vadd.f32 %v1323, %v1309
          %v1325 = vadd.f32 %v1324, %v1310
          %v1326 = vadd.f32 %v1325, %v1311
          %v1327 = vadd.f32 %v1326, %v1312
          %v1328 = vadd.f32 %v1327, %v1313
          %v1329 = vrot.slane %v1328, 4
          %v1330 = vadd.f32 %v1328, %v1329
          %v1331 = vrot.slane %v1330, 2
          %v1332 = vadd.f32 %v1330, %v1331
          %v1333 = vrot.slane %v1332, 1
          %v1334 = vadd.f32 %v1332, %v1333
          %1335 = vst [vmem:[%s484] sm:$0x1] %v1334
        $region97: #{tpu_custom_call.1} parent=80 // pred_fallthru
          _
        %s1336 = sand.u32 %s190, 1
        %s1337 = scalar_lea.sflag [#allocation6], %s1336
        %s1338 = sand.u32 %s190, 1
        %s1339 = smul.addr %s1338, 128
        %s1340 = scalar_lea.vmem [#allocation7], %s1339
        %s1341 = sand.u32 %s27, 1
        %s1342 = scalar_lea.sflag [#allocation9], %s1341
        %s1343 = sand.u32 %s216, 1
        %s1344 = scalar_lea.vmem [#allocation8], %s1343
        %s1345 = sand.u32 %s27, 1
        %s1346 = scalar_lea.sflag [#allocation9], %s1345
        %s1347 = sand.u32 %s242, 1
        %s1348 = scalar_lea.vmem [#allocation10], %s1347
        // Predicated region
        $region98: #{tpu_custom_call.1} parent=80 // pred_check
          %p1349 = pneg %p200
        $region99: #{tpu_custom_call.1} parent=80 // pred_check_branch
          %1351 = sbr.rel (%p1349) target = $region101
        $region100: #{tpu_custom_call.1} parent=80 // pred_region
          %s1352 = smul.u32 16, %s31
          %s1354 = ssub.s32 2048, 2048
          %1355 = vsyncadd %s1337, %s1354
          %s1356 = smul.addr %s1352, 128
          %s1357 = scalar_lea.hbm %s6, %s1356
          %s1358 = sshll.u32 %s1340, 4
          %s1359 = int_to_ptr.vmem [resolvable:$true] %s1358
          %1364 = dma.vmem_to_hbm [thread:$0]  %s1359, 2048, %s1357, %s1337, 128, 128, 8
        $region101: #{tpu_custom_call.1} parent=80 // pred_fallthru
          _
        // Predicated region
        $region102: #{tpu_custom_call.1} parent=80 // pred_check
          %p1365 = pneg %p226
        $region103: #{tpu_custom_call.1} parent=80 // pred_check_branch
          %1367 = sbr.rel (%p1365) target = $region105
        $region104: #{tpu_custom_call.1} parent=80 // pred_region
          %s1369 = ssub.s32 16, 16
          %1370 = vsyncadd %s1342, %s1369
          %s1371 = smul.addr %s31, 16
          %s1372 = scalar_lea.hbm %s7, %s1371
          %s1374 = sshll.u32 %s1344, 4
          %s1375 = int_to_ptr.vmem [resolvable:$true] %s1374
          %1377 = dma.vmem_to_hbm [thread:$0]  %s1375, 16, %s1372, %s1342
        $region105: #{tpu_custom_call.1} parent=80 // pred_fallthru
          _
        // Predicated region
        $region106: #{tpu_custom_call.1} parent=80 // pred_check
          %p1378 = pneg %p252
        $region107: #{tpu_custom_call.1} parent=80 // pred_check_branch
          %1380 = sbr.rel (%p1378) target = $region109
        $region108: #{tpu_custom_call.1} parent=80 // pred_region
          %s1382 = ssub.s32 16, 16
          %1383 = vsyncadd %s1346, %s1382
          %s1384 = smul.addr %s31, 16
          %s1385 = scalar_lea.hbm %s8, %s1384
          %s1387 = sshll.u32 %s1348, 4
          %s1388 = int_to_ptr.vmem [resolvable:$true] %s1387
          %1390 = dma.vmem_to_hbm [thread:$0]  %s1388, 16, %s1385, %s1346
        $region109: #{tpu_custom_call.1} parent=80 // pred_fallthru
          _
      $region81: #{tpu_custom_call.1} parent=5 // pred_fallthru
        _
      %p1391 = scmp.le.s32.totalorder 2, %s22
      // Predicated region
      $region110: #{tpu_custom_call.1} parent=5 // pred_check
        %p1392 = pneg %p1391
      $region111: #{tpu_custom_call.1} parent=5 // pred_check_branch
        %1394 = sbr.rel (%p1392) target = $region113
      $region112: #{tpu_custom_call.1} parent=5 // pred_region
        %s1395 = ssub.s32 %s22, 2
        // Predicated region
        $region114: #{tpu_custom_call.1} parent=112 // pred_check
          %p1396 = pneg %p206
        $region115: #{tpu_custom_call.1} parent=112 // pred_check_branch
          %1398 = sbr.rel (%p1396) target = $region117
        $region116: #{tpu_custom_call.1} parent=112 // pred_region
          %s1399 = sand.u32 %s191, 1
          %s1400 = scalar_lea.sflag [#allocation6], %s1399
          %s1401 = sand.u32 %s191, 1
          %s1402 = smul.addr %s1401, 128
          %s1403 = scalar_lea.vmem [#allocation7], %s1402
          %1404 = dma.done %s1400, 2048
        $region117: #{tpu_custom_call.1} parent=112 // pred_fallthru
          _
        // Predicated region
        $region118: #{tpu_custom_call.1} parent=112 // pred_check
          %p1405 = pneg %p232
        $region119: #{tpu_custom_call.1} parent=112 // pred_check_branch
          %1407 = sbr.rel (%p1405) target = $region121
        $region120: #{tpu_custom_call.1} parent=112 // pred_region
          %s1408 = sand.u32 %s28, 1
          %s1409 = scalar_lea.sflag [#allocation9], %s1408
          %s1410 = sand.u32 %s217, 1
          %s1411 = scalar_lea.vmem [#allocation8], %s1410
          %1412 = dma.done %s1409, 16
        $region121: #{tpu_custom_call.1} parent=112 // pred_fallthru
          _
        // Predicated region
        $region122: #{tpu_custom_call.1} parent=112 // pred_check
          %p1413 = pneg %p258
        $region123: #{tpu_custom_call.1} parent=112 // pred_check_branch
          %1415 = sbr.rel (%p1413) target = $region125
        $region124: #{tpu_custom_call.1} parent=112 // pred_region
          %s1416 = sand.u32 %s28, 1
          %s1417 = scalar_lea.sflag [#allocation9], %s1416
          %s1418 = sand.u32 %s243, 1
          %s1419 = scalar_lea.vmem [#allocation10], %s1418
          %1420 = dma.done %s1417, 16
        $region125: #{tpu_custom_call.1} parent=112 // pred_fallthru
          _
      $region113: #{tpu_custom_call.1} parent=5 // pred_fallthru
        _
    $region6: #{tpu_custom_call.1} parent=1 // loop_footer
      %s26 = sadd.s32 1, %s22
    $region7: #{tpu_custom_call.1} parent=1 // loop_footer_branch
      %21 = sbr.rel target = $region3
    $region8: #{tpu_custom_call.1} parent=1 // loop_exit
      _
    %1421 = vsyncpa [#allocation5], 1
    %s1422 = scalar_lea.sflag [#allocation5], 1
    %1423 = vsyncpa %s1422, 1
    %1424 = vsyncpa [#allocation6], 1
    %s1425 = scalar_lea.sflag [#allocation6], 1
    %1426 = vsyncpa %s1425, 1
    %1427 = vsyncpa [#allocation9], 1
    %s1428 = scalar_lea.sflag [#allocation9], 1
    %1429 = vsyncpa %s1428, 1

</llo_original>
